<compile_context>
chip_gen: v6e
topology: v6e:2x2x1
jax: 0.10.0
libtpu: 0.0.40
codegen_flags: <defaults>
</compile_context>

<pallas_src>
import jax
import jax.numpy as jnp
from jax import lax
from jax.experimental import pallas as pl
from jax.experimental.pallas import tpu as pltpu


def make_mha_kernel(num_heads, seq_len, n_embed, b_blk):
    H, T, C = num_heads, seq_len, n_embed
    HS = C // H
    rows = b_blk * T

    def mha_kernel(x_ref, wqkv_ref, wp_ref, bp_ref, out_ref):
        # x_ref / out_ref: (b_blk, T, C) or lane-dense (1, b_blk, T*C) block
        # wqkv_ref: (C, 3C) bf16, fused [Wq*scale | Wk | Wv], head-major cols
        # wp_ref:   (C, C)  bf16 output projection weight (x @ W form)
        # bp_ref:   (1, C)  f32 output projection bias
        x = x_ref[...].reshape(rows, C).astype(jnp.bfloat16)

        # One fused QKV projection for all heads: (rows, 3C), f32 accumulate.
        qkv = jnp.dot(x, wqkv_ref[...], preferred_element_type=jnp.float32)

        # Additive causal bias, hoisted out of the head loop (an add fuses into
        # the QK^T epilogue; no per-head bool-mask broadcast / vsel).  -1e30 is
        # NaN-safe (vs -inf) if this is later refactored into a KV-tiled loop.
        r = lax.broadcasted_iota(jnp.int32, (T, T), 0)
        c = lax.broadcasted_iota(jnp.int32, (T, T), 1)
        mask_bias = jnp.where(r >= c, 0.0, -1e30).astype(jnp.float32)

        wp = wp_ref[...]  # (C, C) bf16, loaded once
        acc = jnp.zeros((rows, C), dtype=jnp.float32)

        # TODO(synk): for realistic H (8-16) / T (>= 256), replace this static
        # unroll with a heads grid axis or a fori_loop over a VMEM-staged qkv,
        # plus a KV-tiled online softmax (flash style) so per-head (T, T)
        # score blocks are never all live; q_tile 256 on v6e/v7x, 128 on v5e.
        for h in range(H):
            q = qkv[:, h * HS:(h + 1) * HS].reshape(b_blk, T, HS)
            k = qkv[:, C + h * HS:C + (h + 1) * HS].reshape(b_blk, T, HS)
            v = qkv[:, 2 * C + h * HS:2 * C + (h + 1) * HS].reshape(b_blk, T, HS)

            # Scale already folded into Wq; bf16 MXU operands, f32 accumulate.
            s = jnp.einsum("bqd,bkd->bqk",
                           q.astype(jnp.bfloat16), k.astype(jnp.bfloat16),
                           preferred_element_type=jnp.float32)
            s = s + mask_bias

            m = jnp.max(s, axis=-1, keepdims=True)
            e = jnp.exp(s - m)
            l = jnp.sum(e, axis=-1, keepdims=True)
            o = jnp.einsum("bqk,bkd->bqd",
                           e.astype(jnp.bfloat16), v.astype(jnp.bfloat16),
                           preferred_element_type=jnp.float32)
            # Normalize after PV; approx reciprocal runs on the idle EUP slot.
            o = o * pl.reciprocal(l, approx=True)

            # Fold this head's output straight into the projection (no concat).
            acc = acc + jnp.dot(o.reshape(rows, HS).astype(jnp.bfloat16),
                                wp[h * HS:(h + 1) * HS, :],
                                preferred_element_type=jnp.float32)

        out = acc + bp_ref[...]  # broadcast bias (1, C)
        out_ref[...] = out.reshape(out_ref.shape).astype(out_ref.dtype)

    return mha_kernel


def _pick_b_blk(B, T, C, budget_bytes):
    """Largest batch block that fits the VMEM budget, preferring >= 2 grid
    steps (DMA pipelining + both v7x TensorCores) and an MXU-filling M dim."""
    divisors = [d for d in range(1, B + 1) if B % d == 0]

    def vmem_need(bb):
        rows = bb * T
        io = 2 * (2 * rows * C * 4)                 # x + out blocks, double-buffered f32
        weights = (3 * C * C + C * C) * 2 + C * 4   # bf16 wqkv + wp (single-buffered) + bias
        interm = (rows * 3 * C * 4                  # qkv (f32)
                  + rows * C * 4                    # projection accumulator
                  + 2 * bb * T * T * 4              # per-head scores + exp
                  + 2 * rows * C * 2)               # bf16 operand copies
        return io + weights + interm

    fitting = [d for d in divisors if vmem_need(d) <= budget_bytes] or [1]
    # Prefer >= 2 grid steps whenever the batch allows it.
    cand = [d for d in fitting if B // d >= 2] or fitting
    # Among those, smallest block that still gives M = bb*T >= 256 rows
    # (128 is already enough on v5e); otherwise the largest that fits.
    good = [d for d in cand if d * T >= 256]
    return min(good) if good else max(cand)


def multi_head_attention(x, wq, wk, wv, w_proj, b_proj, *, b_blk=None):
    """x: (B, T, C); wq/wk/wv: (H, C, HS); w_proj: (C, C); b_proj: (C,)."""
    B, T, C = x.shape
    H, _, HS = wq.shape
    assert H * HS == C, "num_heads * head_size must equal n_embed"

    # Generation-aware VMEM budget (v7x: 64 MiB/TC, v5e/v6e: 128 MiB physical).
    try:
        vmem_cap = int(pltpu.get_tpu_info().vmem_capacity_bytes)
    except Exception:
        vmem_cap = 64 * 1024 * 1024  # conservative: v7x per-TensorCore VMEM
    vmem_limit = min(vmem_cap * 3 // 4, 100 * 1024 * 1024)

    if b_blk is None:
        b_blk = _pick_b_blk(B, T, C, budget_bytes=vmem_limit // 2)
    assert B % b_blk == 0, "b_blk must divide B"
    grid_b = B // b_blk

    # Pack per-head weights into one lane-dense (C, 3C) matrix (head-major
    # columns), folding the C**-0.5 scale into the Wq third; ship as bf16.
    scale = C ** (-0.5)  # matches PyTorch: scales by n_embed, not head_size
    wq_wide = jnp.transpose(wq, (1, 0, 2)).reshape(C, C) * scale
    wk_wide = jnp.transpose(wk, (1, 0, 2)).reshape(C, C)
    wv_wide = jnp.transpose(wv, (1, 0, 2)).reshape(C, C)
    wqkv = jnp.concatenate([wq_wide, wk_wide, wv_wide], axis=-1).astype(jnp.bfloat16)
    wp = w_proj.astype(jnp.bfloat16)
    bp = b_proj.reshape(1, C).astype(jnp.float32)

    # Lane-dense I/O layout when C under-fills the 128 lanes AND the block is
    # big enough to also fill the 8 sublanes; otherwise the natural 3-D block.
    flat = (C % 128 != 0) and ((T * C) % 128 == 0) and (b_blk % 8 == 0)
    if flat:
        x_in = x.reshape(grid_b, b_blk, T * C)
        io_block = (1, b_blk, T * C)
        out_struct = jax.ShapeDtypeStruct((grid_b, b_blk, T * C), x.dtype)
    else:
        x_in = x
        io_block = (b_blk, T, C)
        out_struct = jax.ShapeDtypeStruct((B, T, C), x.dtype)

    kernel = make_mha_kernel(H, T, C, b_blk)

    def build_call(single_buffer_weights):
        # Constant index_map => weights only need a single VMEM buffer.
        wmode = {"pipeline_mode": pl.Buffered(1)} if single_buffer_weights else {}
        return pl.pallas_call(
            kernel,
            out_shape=out_struct,
            grid_spec=pltpu.PrefetchScalarGridSpec(
                num_scalar_prefetch=0,
                grid=(grid_b,),
                in_specs=[
                    pl.BlockSpec(io_block, lambda b: (b, 0, 0)),          # x
                    pl.BlockSpec((C, 3 * C), lambda b: (0, 0), **wmode),  # Wqkv
                    pl.BlockSpec((C, C), lambda b: (0, 0), **wmode),      # Wproj
                    pl.BlockSpec((1, C), lambda b: (0, 0), **wmode),      # bproj
                ],
                out_specs=pl.BlockSpec(io_block, lambda b: (b, 0, 0)),
            ),
            compiler_params=pltpu.CompilerParams(
                dimension_semantics=("parallel",),
                vmem_limit_bytes=vmem_limit,
            ),
        )

    try:
        out = build_call(True)(x_in, wqkv, wp, bp)
    except Exception:
        # Fallback for jax/Mosaic versions without BlockSpec pipeline_mode:
        # default double-buffered weights (only costs a little extra VMEM).
        out = build_call(False)(x_in, wqkv, wp, bp)

    return out.reshape(B, T, C)


def reference_mha(x, wq, wk, wv, w_proj, b_proj):
    """Pure-JAX f32 reference mirroring the PyTorch forward."""
    B, T, C = x.shape
    H = wq.shape[0]
    outs = []
    for h in range(H):
        q = x @ wq[h]
        k = x @ wk[h]
        v = x @ wv[h]
        wei = (q @ jnp.swapaxes(k, -2, -1)) * C ** (-0.5)
        mask = jnp.tril(jnp.ones((T, T), dtype=bool))
        wei = jnp.where(mask, wei, -jnp.inf)
        wei = jax.nn.softmax(wei, axis=-1)
        outs.append(wei @ v)
    cat = jnp.concatenate(outs, axis=-1)
    return cat @ w_proj + b_proj


if __name__ == "__main__":
    # Small shapes consistent with the module: num_heads * head_size == n_embed
    B, T = 2, 8               # batch, sequence (== block_size)
    n_embed = 32
    num_heads = 4
    head_size = n_embed // num_heads

    key = jax.random.PRNGKey(0)
    kx, kq, kk, kv, kw, kb = jax.random.split(key, 6)

    x = jax.random.normal(kx, (B, T, n_embed), dtype=jnp.float32)
    wq = jax.random.normal(kq, (num_heads, n_embed, head_size), dtype=jnp.float32) * 0.1
    wk = jax.random.normal(kk, (num_heads, n_embed, head_size), dtype=jnp.float32) * 0.1
    wv = jax.random.normal(kv, (num_heads, n_embed, head_size), dtype=jnp.float32) * 0.1
    w_proj = jax.random.normal(kw, (n_embed, n_embed), dtype=jnp.float32) * 0.1
    b_proj = jax.random.normal(kb, (n_embed,), dtype=jnp.float32) * 0.1

    out = multi_head_attention(x, wq, wk, wv, w_proj, b_proj)
    out = jax.block_until_ready(out)

    ref = reference_mha(x, wq, wk, wv, w_proj, b_proj)
    assert out.shape == (B, T, n_embed)
    # bf16 MXU operands (with f32 accumulation) => looser tolerance than f32.
    assert jnp.allclose(out, ref, atol=3e-2, rtol=3e-2), "mismatch vs reference"

    print("KERNEL_OK")
</pallas_src>

<mosaic_0001>
module attributes {stable_mosaic.version = 11 : i64} {
  func.func @mha_kernel(%arg0: i32, %arg1: memref<1x8x32xf32, #tpu.memory_space<vmem>>, %arg2: memref<32x96xbf16, #tpu.memory_space<vmem>>, %arg3: memref<32x32xbf16, #tpu.memory_space<vmem>>, %arg4: memref<1x32xf32, #tpu.memory_space<vmem>>, %arg5: memref<1x8x32xf32, #tpu.memory_space<vmem>>) attributes {dimension_semantics = [#tpu.dimension_semantics<parallel>], iteration_bounds = array<i64: 2>, scalar_prefetch = 0 : i64, scratch_operands = 0 : i64, tpu.core_type = #tpu.core_type<tc>, window_params = [{transform_indices = @transform_0, window_bounds = array<i64: 1, 8, 32>}, {pipeline_mode = #tpu.pipeline_mode<synchronous>, transform_indices = @transform_1, window_bounds = array<i64: 32, 96>}, {pipeline_mode = #tpu.pipeline_mode<synchronous>, transform_indices = @transform_2, window_bounds = array<i64: 32, 32>}, {pipeline_mode = #tpu.pipeline_mode<synchronous>, transform_indices = @transform_3, window_bounds = array<i64: 1, 32>}, {transform_indices = @transform_4, window_bounds = array<i64: 1, 8, 32>}]} {
    %c0 = arith.constant 0 : index
    %c0_0 = arith.constant 0 : index
    %c0_1 = arith.constant 0 : index
    %0 = vector.load %arg1[%c0, %c0_0, %c0_1] : memref<1x8x32xf32, #tpu.memory_space<vmem>>, vector<1x8x32xf32>
    %1 = vector.shape_cast %0 : vector<1x8x32xf32> to vector<8x32xf32>
    %2 = arith.truncf %1 : vector<8x32xf32> to vector<8x32xbf16>
    %c0_2 = arith.constant 0 : index
    %c0_3 = arith.constant 0 : index
    %3 = vector.load %arg2[%c0_2, %c0_3] : memref<32x96xbf16, #tpu.memory_space<vmem>>, vector<32x96xbf16>
    %cst = arith.constant dense<0.000000e+00> : vector<8x96xf32>
    %4 = tpu.matmul %2, %3, %cst {dimension_numbers = #tpu.dot_dimension_numbers<[1], [0], [0], [1], [0, 0, 1, 1], [], []>} : vector<8x32xbf16>, vector<32x96xbf16>, vector<8x96xf32> -> vector<8x96xf32>
    %5 = tpu.iota {dimensions = array<i32: 0>} : vector<8x8xi32>
    %6 = tpu.iota {dimensions = array<i32: 1>} : vector<8x8xi32>
    %7 = arith.cmpi sge, %5, %6 : vector<8x8xi32>
    %cst_4 = arith.constant 0.000000e+00 : f32
    %cst_5 = arith.constant -1.000000e+30 : f32
    %8 = vector.broadcast %cst_4 : f32 to vector<8x8xf32>
    %9 = vector.broadcast %cst_5 : f32 to vector<8x8xf32>
    %10 = arith.select %7, %8, %9 : vector<8x8xi1>, vector<8x8xf32>
    %c0_6 = arith.constant 0 : index
    %c0_7 = arith.constant 0 : index
    %11 = vector.load %arg3[%c0_6, %c0_7] : memref<32x32xbf16, #tpu.memory_space<vmem>>, vector<32x32xbf16>
    %cst_8 = arith.constant 0.000000e+00 : f32
    %12 = vector.broadcast %cst_8 : f32 to vector<8x32xf32>
    %13 = vector.extract_strided_slice %4 {offsets = [0, 0], sizes = [8, 8], strides = [1, 1]} : vector<8x96xf32> to vector<8x8xf32>
    %14 = vector.shape_cast %13 : vector<8x8xf32> to vector<1x8x8xf32>
    %15 = vector.extract_strided_slice %4 {offsets = [0, 32], sizes = [8, 8], strides = [1, 1]} : vector<8x96xf32> to vector<8x8xf32>
    %16 = vector.shape_cast %15 : vector<8x8xf32> to vector<1x8x8xf32>
    %17 = vector.extract_strided_slice %4 {offsets = [0, 64], sizes = [8, 8], strides = [1, 1]} : vector<8x96xf32> to vector<8x8xf32>
    %18 = vector.shape_cast %17 : vector<8x8xf32> to vector<1x8x8xf32>
    %19 = arith.truncf %14 : vector<1x8x8xf32> to vector<1x8x8xbf16>
    %20 = arith.truncf %16 : vector<1x8x8xf32> to vector<1x8x8xbf16>
    "tpu.trace_start"() <{level = 10 : i32, message = "bqd,bkd->bqk"}> : () -> ()
    %cst_9 = arith.constant dense<0.000000e+00> : vector<1x8x8xf32>
    %21 = tpu.matmul %19, %20, %cst_9 {dimension_numbers = #tpu.dot_dimension_numbers<[2], [2], [1], [1], [0, 0, 0, 1, 1, 1], [0], [0]>} : vector<1x8x8xbf16>, vector<1x8x8xbf16>, vector<1x8x8xf32> -> vector<1x8x8xf32>
    "tpu.trace_stop"() : () -> ()
    %22 = vector.shape_cast %10 : vector<8x8xf32> to vector<1x8x8xf32>
    %23 = arith.addf %21, %22 : vector<1x8x8xf32>
    %cst_10 = arith.constant dense<0xFF800000> : vector<1x8xf32>
    %24 = vector.multi_reduction <maximumf>, %23, %cst_10 [2] : vector<1x8x8xf32> to vector<1x8xf32>
    %25 = vector.shape_cast %24 : vector<1x8xf32> to vector<1x8x1xf32>
    %26 = vector.broadcast %25 : vector<1x8x1xf32> to vector<1x8x8xf32>
    %27 = arith.subf %23, %26 : vector<1x8x8xf32>
    %28 = math.exp %27 : vector<1x8x8xf32>
    %cst_11 = arith.constant dense<0.000000e+00> : vector<1x8xf32>
    %29 = vector.multi_reduction <add>, %28, %cst_11 [2] : vector<1x8x8xf32> to vector<1x8xf32>
    %30 = vector.shape_cast %29 : vector<1x8xf32> to vector<1x8x1xf32>
    %31 = arith.truncf %28 : vector<1x8x8xf32> to vector<1x8x8xbf16>
    %32 = arith.truncf %18 : vector<1x8x8xf32> to vector<1x8x8xbf16>
    "tpu.trace_start"() <{level = 10 : i32, message = "bqk,bkd->bqd"}> : () -> ()
    %cst_12 = arith.constant dense<0.000000e+00> : vector<1x8x8xf32>
    %33 = tpu.matmul %31, %32, %cst_12 {dimension_numbers = #tpu.dot_dimension_numbers<[2], [1], [1], [2], [0, 0, 0, 1, 1, 2], [0], [0]>} : vector<1x8x8xbf16>, vector<1x8x8xbf16>, vector<1x8x8xf32> -> vector<1x8x8xf32>
    "tpu.trace_stop"() : () -> ()
    %34 = tpu.reciprocal %30 {approx = true} : vector<1x8x1xf32> -> vector<1x8x1xf32>
    %35 = vector.broadcast %34 : vector<1x8x1xf32> to vector<1x8x8xf32>
    %36 = arith.mulf %33, %35 : vector<1x8x8xf32>
    %37 = vector.shape_cast %36 : vector<1x8x8xf32> to vector<8x8xf32>
    %38 = arith.truncf %37 : vector<8x8xf32> to vector<8x8xbf16>
    %39 = vector.extract_strided_slice %11 {offsets = [0, 0], sizes = [8, 32], strides = [1, 1]} : vector<32x32xbf16> to vector<8x32xbf16>
    %cst_13 = arith.constant dense<0.000000e+00> : vector<8x32xf32>
    %40 = tpu.matmul %38, %39, %cst_13 {dimension_numbers = #tpu.dot_dimension_numbers<[1], [0], [0], [1], [0, 0, 1, 1], [], []>} : vector<8x8xbf16>, vector<8x32xbf16>, vector<8x32xf32> -> vector<8x32xf32>
    %41 = arith.addf %12, %40 : vector<8x32xf32>
    %42 = vector.extract_strided_slice %4 {offsets = [0, 8], sizes = [8, 8], strides = [1, 1]} : vector<8x96xf32> to vector<8x8xf32>
    %43 = vector.shape_cast %42 : vector<8x8xf32> to vector<1x8x8xf32>
    %44 = vector.extract_strided_slice %4 {offsets = [0, 40], sizes = [8, 8], strides = [1, 1]} : vector<8x96xf32> to vector<8x8xf32>
    %45 = vector.shape_cast %44 : vector<8x8xf32> to vector<1x8x8xf32>
    %46 = vector.extract_strided_slice %4 {offsets = [0, 72], sizes = [8, 8], strides = [1, 1]} : vector<8x96xf32> to vector<8x8xf32>
    %47 = vector.shape_cast %46 : vector<8x8xf32> to vector<1x8x8xf32>
    %48 = arith.truncf %43 : vector<1x8x8xf32> to vector<1x8x8xbf16>
    %49 = arith.truncf %45 : vector<1x8x8xf32> to vector<1x8x8xbf16>
    "tpu.trace_start"() <{level = 10 : i32, message = "bqd,bkd->bqk"}> : () -> ()
    %cst_14 = arith.constant dense<0.000000e+00> : vector<1x8x8xf32>
    %50 = tpu.matmul %48, %49, %cst_14 {dimension_numbers = #tpu.dot_dimension_numbers<[2], [2], [1], [1], [0, 0, 0, 1, 1, 1], [0], [0]>} : vector<1x8x8xbf16>, vector<1x8x8xbf16>, vector<1x8x8xf32> -> vector<1x8x8xf32>
    "tpu.trace_stop"() : () -> ()
    %51 = vector.shape_cast %10 : vector<8x8xf32> to vector<1x8x8xf32>
    %52 = arith.addf %50, %51 : vector<1x8x8xf32>
    %cst_15 = arith.constant dense<0xFF800000> : vector<1x8xf32>
    %53 = vector.multi_reduction <maximumf>, %52, %cst_15 [2] : vector<1x8x8xf32> to vector<1x8xf32>
    %54 = vector.shape_cast %53 : vector<1x8xf32> to vector<1x8x1xf32>
    %55 = vector.broadcast %54 : vector<1x8x1xf32> to vector<1x8x8xf32>
    %56 = arith.subf %52, %55 : vector<1x8x8xf32>
    %57 = math.exp %56 : vector<1x8x8xf32>
    %cst_16 = arith.constant dense<0.000000e+00> : vector<1x8xf32>
    %58 = vector.multi_reduction <add>, %57, %cst_16 [2] : vector<1x8x8xf32> to vector<1x8xf32>
    %59 = vector.shape_cast %58 : vector<1x8xf32> to vector<1x8x1xf32>
    %60 = arith.truncf %57 : vector<1x8x8xf32> to vector<1x8x8xbf16>
    %61 = arith.truncf %47 : vector<1x8x8xf32> to vector<1x8x8xbf16>
    "tpu.trace_start"() <{level = 10 : i32, message = "bqk,bkd->bqd"}> : () -> ()
    %cst_17 = arith.constant dense<0.000000e+00> : vector<1x8x8xf32>
    %62 = tpu.matmul %60, %61, %cst_17 {dimension_numbers = #tpu.dot_dimension_numbers<[2], [1], [1], [2], [0, 0, 0, 1, 1, 2], [0], [0]>} : vector<1x8x8xbf16>, vector<1x8x8xbf16>, vector<1x8x8xf32> -> vector<1x8x8xf32>
    "tpu.trace_stop"() : () -> ()
    %63 = tpu.reciprocal %59 {approx = true} : vector<1x8x1xf32> -> vector<1x8x1xf32>
    %64 = vector.broadcast %63 : vector<1x8x1xf32> to vector<1x8x8xf32>
    %65 = arith.mulf %62, %64 : vector<1x8x8xf32>
    %66 = vector.shape_cast %65 : vector<1x8x8xf32> to vector<8x8xf32>
    %67 = arith.truncf %66 : vector<8x8xf32> to vector<8x8xbf16>
    %68 = vector.extract_strided_slice %11 {offsets = [8, 0], sizes = [8, 32], strides = [1, 1]} : vector<32x32xbf16> to vector<8x32xbf16>
    %cst_18 = arith.constant dense<0.000000e+00> : vector<8x32xf32>
    %69 = tpu.matmul %67, %68, %cst_18 {dimension_numbers = #tpu.dot_dimension_numbers<[1], [0], [0], [1], [0, 0, 1, 1], [], []>} : vector<8x8xbf16>, vector<8x32xbf16>, vector<8x32xf32> -> vector<8x32xf32>
    %70 = arith.addf %41, %69 : vector<8x32xf32>
    %71 = vector.extract_strided_slice %4 {offsets = [0, 16], sizes = [8, 8], strides = [1, 1]} : vector<8x96xf32> to vector<8x8xf32>
    %72 = vector.shape_cast %71 : vector<8x8xf32> to vector<1x8x8xf32>
    %73 = vector.extract_strided_slice %4 {offsets = [0, 48], sizes = [8, 8], strides = [1, 1]} : vector<8x96xf32> to vector<8x8xf32>
    %74 = vector.shape_cast %73 : vector<8x8xf32> to vector<1x8x8xf32>
    %75 = vector.extract_strided_slice %4 {offsets = [0, 80], sizes = [8, 8], strides = [1, 1]} : vector<8x96xf32> to vector<8x8xf32>
    %76 = vector.shape_cast %75 : vector<8x8xf32> to vector<1x8x8xf32>
    %77 = arith.truncf %72 : vector<1x8x8xf32> to vector<1x8x8xbf16>
    %78 = arith.truncf %74 : vector<1x8x8xf32> to vector<1x8x8xbf16>
    "tpu.trace_start"() <{level = 10 : i32, message = "bqd,bkd->bqk"}> : () -> ()
    %cst_19 = arith.constant dense<0.000000e+00> : vector<1x8x8xf32>
    %79 = tpu.matmul %77, %78, %cst_19 {dimension_numbers = #tpu.dot_dimension_numbers<[2], [2], [1], [1], [0, 0, 0, 1, 1, 1], [0], [0]>} : vector<1x8x8xbf16>, vector<1x8x8xbf16>, vector<1x8x8xf32> -> vector<1x8x8xf32>
    "tpu.trace_stop"() : () -> ()
    %80 = vector.shape_cast %10 : vector<8x8xf32> to vector<1x8x8xf32>
    %81 = arith.addf %79, %80 : vector<1x8x8xf32>
    %cst_20 = arith.constant dense<0xFF800000> : vector<1x8xf32>
    %82 = vector.multi_reduction <maximumf>, %81, %cst_20 [2] : vector<1x8x8xf32> to vector<1x8xf32>
    %83 = vector.shape_cast %82 : vector<1x8xf32> to vector<1x8x1xf32>
    %84 = vector.broadcast %83 : vector<1x8x1xf32> to vector<1x8x8xf32>
    %85 = arith.subf %81, %84 : vector<1x8x8xf32>
    %86 = math.exp %85 : vector<1x8x8xf32>
    %cst_21 = arith.constant dense<0.000000e+00> : vector<1x8xf32>
    %87 = vector.multi_reduction <add>, %86, %cst_21 [2] : vector<1x8x8xf32> to vector<1x8xf32>
    %88 = vector.shape_cast %87 : vector<1x8xf32> to vector<1x8x1xf32>
    %89 = arith.truncf %86 : vector<1x8x8xf32> to vector<1x8x8xbf16>
    %90 = arith.truncf %76 : vector<1x8x8xf32> to vector<1x8x8xbf16>
    "tpu.trace_start"() <{level = 10 : i32, message = "bqk,bkd->bqd"}> : () -> ()
    %cst_22 = arith.constant dense<0.000000e+00> : vector<1x8x8xf32>
    %91 = tpu.matmul %89, %90, %cst_22 {dimension_numbers = #tpu.dot_dimension_numbers<[2], [1], [1], [2], [0, 0, 0, 1, 1, 2], [0], [0]>} : vector<1x8x8xbf16>, vector<1x8x8xbf16>, vector<1x8x8xf32> -> vector<1x8x8xf32>
    "tpu.trace_stop"() : () -> ()
    %92 = tpu.reciprocal %88 {approx = true} : vector<1x8x1xf32> -> vector<1x8x1xf32>
    %93 = vector.broadcast %92 : vector<1x8x1xf32> to vector<1x8x8xf32>
    %94 = arith.mulf %91, %93 : vector<1x8x8xf32>
    %95 = vector.shape_cast %94 : vector<1x8x8xf32> to vector<8x8xf32>
    %96 = arith.truncf %95 : vector<8x8xf32> to vector<8x8xbf16>
    %97 = vector.extract_strided_slice %11 {offsets = [16, 0], sizes = [8, 32], strides = [1, 1]} : vector<32x32xbf16> to vector<8x32xbf16>
    %cst_23 = arith.constant dense<0.000000e+00> : vector<8x32xf32>
    %98 = tpu.matmul %96, %97, %cst_23 {dimension_numbers = #tpu.dot_dimension_numbers<[1], [0], [0], [1], [0, 0, 1, 1], [], []>} : vector<8x8xbf16>, vector<8x32xbf16>, vector<8x32xf32> -> vector<8x32xf32>
    %99 = arith.addf %70, %98 : vector<8x32xf32>
    %100 = vector.extract_strided_slice %4 {offsets = [0, 24], sizes = [8, 8], strides = [1, 1]} : vector<8x96xf32> to vector<8x8xf32>
    %101 = vector.shape_cast %100 : vector<8x8xf32> to vector<1x8x8xf32>
    %102 = vector.extract_strided_slice %4 {offsets = [0, 56], sizes = [8, 8], strides = [1, 1]} : vector<8x96xf32> to vector<8x8xf32>
    %103 = vector.shape_cast %102 : vector<8x8xf32> to vector<1x8x8xf32>
    %104 = vector.extract_strided_slice %4 {offsets = [0, 88], sizes = [8, 8], strides = [1, 1]} : vector<8x96xf32> to vector<8x8xf32>
    %105 = vector.shape_cast %104 : vector<8x8xf32> to vector<1x8x8xf32>
    %106 = arith.truncf %101 : vector<1x8x8xf32> to vector<1x8x8xbf16>
    %107 = arith.truncf %103 : vector<1x8x8xf32> to vector<1x8x8xbf16>
    "tpu.trace_start"() <{level = 10 : i32, message = "bqd,bkd->bqk"}> : () -> ()
    %cst_24 = arith.constant dense<0.000000e+00> : vector<1x8x8xf32>
    %108 = tpu.matmul %106, %107, %cst_24 {dimension_numbers = #tpu.dot_dimension_numbers<[2], [2], [1], [1], [0, 0, 0, 1, 1, 1], [0], [0]>} : vector<1x8x8xbf16>, vector<1x8x8xbf16>, vector<1x8x8xf32> -> vector<1x8x8xf32>
    "tpu.trace_stop"() : () -> ()
    %109 = vector.shape_cast %10 : vector<8x8xf32> to vector<1x8x8xf32>
    %110 = arith.addf %108, %109 : vector<1x8x8xf32>
    %cst_25 = arith.constant dense<0xFF800000> : vector<1x8xf32>
    %111 = vector.multi_reduction <maximumf>, %110, %cst_25 [2] : vector<1x8x8xf32> to vector<1x8xf32>
    %112 = vector.shape_cast %111 : vector<1x8xf32> to vector<1x8x1xf32>
    %113 = vector.broadcast %112 : vector<1x8x1xf32> to vector<1x8x8xf32>
    %114 = arith.subf %110, %113 : vector<1x8x8xf32>
    %115 = math.exp %114 : vector<1x8x8xf32>
    %cst_26 = arith.constant dense<0.000000e+00> : vector<1x8xf32>
    %116 = vector.multi_reduction <add>, %115, %cst_26 [2] : vector<1x8x8xf32> to vector<1x8xf32>
    %117 = vector.shape_cast %116 : vector<1x8xf32> to vector<1x8x1xf32>
    %118 = arith.truncf %115 : vector<1x8x8xf32> to vector<1x8x8xbf16>
    %119 = arith.truncf %105 : vector<1x8x8xf32> to vector<1x8x8xbf16>
    "tpu.trace_start"() <{level = 10 : i32, message = "bqk,bkd->bqd"}> : () -> ()
    %cst_27 = arith.constant dense<0.000000e+00> : vector<1x8x8xf32>
    %120 = tpu.matmul %118, %119, %cst_27 {dimension_numbers = #tpu.dot_dimension_numbers<[2], [1], [1], [2], [0, 0, 0, 1, 1, 2], [0], [0]>} : vector<1x8x8xbf16>, vector<1x8x8xbf16>, vector<1x8x8xf32> -> vector<1x8x8xf32>
    "tpu.trace_stop"() : () -> ()
    %121 = tpu.reciprocal %117 {approx = true} : vector<1x8x1xf32> -> vector<1x8x1xf32>
    %122 = vector.broadcast %121 : vector<1x8x1xf32> to vector<1x8x8xf32>
    %123 = arith.mulf %120, %122 : vector<1x8x8xf32>
    %124 = vector.shape_cast %123 : vector<1x8x8xf32> to vector<8x8xf32>
    %125 = arith.truncf %124 : vector<8x8xf32> to vector<8x8xbf16>
    %126 = vector.extract_strided_slice %11 {offsets = [24, 0], sizes = [8, 32], strides = [1, 1]} : vector<32x32xbf16> to vector<8x32xbf16>
    %cst_28 = arith.constant dense<0.000000e+00> : vector<8x32xf32>
    %127 = tpu.matmul %125, %126, %cst_28 {dimension_numbers = #tpu.dot_dimension_numbers<[1], [0], [0], [1], [0, 0, 1, 1], [], []>} : vector<8x8xbf16>, vector<8x32xbf16>, vector<8x32xf32> -> vector<8x32xf32>
    %128 = arith.addf %99, %127 : vector<8x32xf32>
    %c0_29 = arith.constant 0 : index
    %c0_30 = arith.constant 0 : index
    %129 = vector.load %arg4[%c0_29, %c0_30] : memref<1x32xf32, #tpu.memory_space<vmem>>, vector<1x32xf32>
    %130 = vector.broadcast %129 : vector<1x32xf32> to vector<8x32xf32>
    %131 = arith.addf %128, %130 : vector<8x32xf32>
    %132 = vector.shape_cast %131 : vector<8x32xf32> to vector<1x8x32xf32>
    %c0_31 = arith.constant 0 : index
    %c0_32 = arith.constant 0 : index
    %c0_33 = arith.constant 0 : index
    %133 = vector.load %arg5[%c0_31, %c0_32, %c0_33] : memref<1x8x32xf32, #tpu.memory_space<vmem>>, vector<1x8x32xf32>
    tpu.vector_store %arg5[%c0_31, %c0_32, %c0_33], %132 {strides = array<i32>} : memref<1x8x32xf32, #tpu.memory_space<vmem>>, vector<1x8x32xf32>,
    return
  }
  func.func @transform_0(%arg0: i32) -> (i32, i32, i32) {
    %c0_i32 = arith.constant 0 : i32
    %c0_i32_0 = arith.constant 0 : i32
    %c0_i32_1 = arith.constant 0 : i32
    return %arg0, %c0_i32, %c0_i32_0 : i32, i32, i32
  }
  func.func @transform_1(%arg0: i32) -> (i32, i32) {
    %c0_i32 = arith.constant 0 : i32
    %c0_i32_0 = arith.constant 0 : i32
    %c0_i32_1 = arith.constant 0 : i32
    return %c0_i32, %c0_i32_0 : i32, i32
  }
  func.func @transform_2(%arg0: i32) -> (i32, i32) {
    %c0_i32 = arith.constant 0 : i32
    %c0_i32_0 = arith.constant 0 : i32
    %c0_i32_1 = arith.constant 0 : i32
    return %c0_i32, %c0_i32_0 : i32, i32
  }
  func.func @transform_3(%arg0: i32) -> (i32, i32) {
    %c0_i32 = arith.constant 0 : i32
    %c0_i32_0 = arith.constant 0 : i32
    %c0_i32_1 = arith.constant 0 : i32
    return %c0_i32, %c0_i32_0 : i32, i32
  }
  func.func @transform_4(%arg0: i32) -> (i32, i32, i32) {
    %c0_i32 = arith.constant 0 : i32
    %c0_i32_0 = arith.constant 0 : i32
    %c0_i32_1 = arith.constant 0 : i32
    return %arg0, %c0_i32, %c0_i32_0 : i32, i32, i32
  }
}

module attributes {stable_mosaic.version = 11 : i64} {
  func.func @mha_kernel(%arg0: i32, %arg1: memref<1x8x32xf32, #tpu.memory_space<vmem>>, %arg2: memref<32x96xbf16, #tpu.memory_space<vmem>>, %arg3: memref<32x32xbf16, #tpu.memory_space<vmem>>, %arg4: memref<1x32xf32, #tpu.memory_space<vmem>>, %arg5: memref<1x8x32xf32, #tpu.memory_space<vmem>>) attributes {dimension_semantics = [#tpu.dimension_semantics<parallel>], iteration_bounds = array<i64: 2>, scalar_prefetch = 0 : i64, scratch_operands = 0 : i64, tpu.core_type = #tpu.core_type<tc>, window_params = [{transform_indices = @transform_0, window_bounds = array<i64: 1, 8, 32>}, {pipeline_mode = #tpu.pipeline_mode<synchronous>, transform_indices = @transform_1, window_bounds = array<i64: 32, 96>}, {pipeline_mode = #tpu.pipeline_mode<synchronous>, transform_indices = @transform_2, window_bounds = array<i64: 32, 32>}, {pipeline_mode = #tpu.pipeline_mode<synchronous>, transform_indices = @transform_3, window_bounds = array<i64: 1, 32>}, {transform_indices = @transform_4, window_bounds = array<i64: 1, 8, 32>}]} {
    %c0 = arith.constant 0 : index
    %c0_0 = arith.constant 0 : index
    %c0_1 = arith.constant 0 : index
    %0 = vector.load %arg1[%c0, %c0_0, %c0_1] : memref<1x8x32xf32, #tpu.memory_space<vmem>>, vector<1x8x32xf32>
    %1 = vector.shape_cast %0 : vector<1x8x32xf32> to vector<8x32xf32>
    %2 = arith.truncf %1 : vector<8x32xf32> to vector<8x32xbf16>
    %c0_2 = arith.constant 0 : index
    %c0_3 = arith.constant 0 : index
    %3 = vector.load %arg2[%c0_2, %c0_3] : memref<32x96xbf16, #tpu.memory_space<vmem>>, vector<32x96xbf16>
    %cst = arith.constant dense<0.000000e+00> : vector<8x96xf32>
    %4 = tpu.matmul %2, %3, %cst {dimension_numbers = #tpu.dot_dimension_numbers<[1], [0], [0], [1], [0, 0, 1, 1], [], []>} : vector<8x32xbf16>, vector<32x96xbf16>, vector<8x96xf32> -> vector<8x96xf32>
    %5 = tpu.iota {dimensions = array<i32: 0>} : vector<8x8xi32>
    %6 = tpu.iota {dimensions = array<i32: 1>} : vector<8x8xi32>
    %7 = arith.cmpi sge, %5, %6 : vector<8x8xi32>
    %cst_4 = arith.constant 0.000000e+00 : f32
    %cst_5 = arith.constant -1.000000e+30 : f32
    %8 = vector.broadcast %cst_4 : f32 to vector<8x8xf32>
    %9 = vector.broadcast %cst_5 : f32 to vector<8x8xf32>
    %10 = arith.select %7, %8, %9 : vector<8x8xi1>, vector<8x8xf32>
    %c0_6 = arith.constant 0 : index
    %c0_7 = arith.constant 0 : index
    %11 = vector.load %arg3[%c0_6, %c0_7] : memref<32x32xbf16, #tpu.memory_space<vmem>>, vector<32x32xbf16>
    %cst_8 = arith.constant 0.000000e+00 : f32
    %12 = vector.broadcast %cst_8 : f32 to vector<8x32xf32>
    %13 = vector.extract_strided_slice %4 {offsets = [0, 0], sizes = [8, 8], strides = [1, 1]} : vector<8x96xf32> to vector<8x8xf32>
    %14 = vector.shape_cast %13 : vector<8x8xf32> to vector<1x8x8xf32>
    %15 = vector.extract_strided_slice %4 {offsets = [0, 32], sizes = [8, 8], strides = [1, 1]} : vector<8x96xf32> to vector<8x8xf32>
    %16 = vector.shape_cast %15 : vector<8x8xf32> to vector<1x8x8xf32>
    %17 = vector.extract_strided_slice %4 {offsets = [0, 64], sizes = [8, 8], strides = [1, 1]} : vector<8x96xf32> to vector<8x8xf32>
    %18 = vector.shape_cast %17 : vector<8x8xf32> to vector<1x8x8xf32>
    %19 = arith.truncf %14 : vector<1x8x8xf32> to vector<1x8x8xbf16>
    %20 = arith.truncf %16 : vector<1x8x8xf32> to vector<1x8x8xbf16>
    "tpu.trace_start"() <{level = 10 : i32, message = "bqd,bkd->bqk"}> : () -> ()
    %cst_9 = arith.constant dense<0.000000e+00> : vector<1x8x8xf32>
    %21 = tpu.matmul %19, %20, %cst_9 {dimension_numbers = #tpu.dot_dimension_numbers<[2], [2], [1], [1], [0, 0, 0, 1, 1, 1], [0], [0]>} : vector<1x8x8xbf16>, vector<1x8x8xbf16>, vector<1x8x8xf32> -> vector<1x8x8xf32>
    "tpu.trace_stop"() : () -> ()
    %22 = vector.shape_cast %10 : vector<8x8xf32> to vector<1x8x8xf32>
    %23 = arith.addf %21, %22 : vector<1x8x8xf32>
    %cst_10 = arith.constant dense<0xFF800000> : vector<1x8xf32>
    %24 = vector.multi_reduction <maximumf>, %23, %cst_10 [2] : vector<1x8x8xf32> to vector<1x8xf32>
    %25 = vector.shape_cast %24 : vector<1x8xf32> to vector<1x8x1xf32>
    %26 = vector.broadcast %25 : vector<1x8x1xf32> to vector<1x8x8xf32>
    %27 = arith.subf %23, %26 : vector<1x8x8xf32>
    %28 = math.exp %27 : vector<1x8x8xf32>
    %cst_11 = arith.constant dense<0.000000e+00> : vector<1x8xf32>
    %29 = vector.multi_reduction <add>, %28, %cst_11 [2] : vector<1x8x8xf32> to vector<1x8xf32>
    %30 = vector.shape_cast %29 : vector<1x8xf32> to vector<1x8x1xf32>
    %31 = arith.truncf %28 : vector<1x8x8xf32> to vector<1x8x8xbf16>
    %32 = arith.truncf %18 : vector<1x8x8xf32> to vector<1x8x8xbf16>
    "tpu.trace_start"() <{level = 10 : i32, message = "bqk,bkd->bqd"}> : () -> ()
    %cst_12 = arith.constant dense<0.000000e+00> : vector<1x8x8xf32>
    %33 = tpu.matmul %31, %32, %cst_12 {dimension_numbers = #tpu.dot_dimension_numbers<[2], [1], [1], [2], [0, 0, 0, 1, 1, 2], [0], [0]>} : vector<1x8x8xbf16>, vector<1x8x8xbf16>, vector<1x8x8xf32> -> vector<1x8x8xf32>
    "tpu.trace_stop"() : () -> ()
    %34 = tpu.reciprocal %30 {approx = true} : vector<1x8x1xf32> -> vector<1x8x1xf32>
    %35 = vector.broadcast %34 : vector<1x8x1xf32> to vector<1x8x8xf32>
    %36 = arith.mulf %33, %35 : vector<1x8x8xf32>
    %37 = vector.shape_cast %36 : vector<1x8x8xf32> to vector<8x8xf32>
    %38 = arith.truncf %37 : vector<8x8xf32> to vector<8x8xbf16>
    %39 = vector.extract_strided_slice %11 {offsets = [0, 0], sizes = [8, 32], strides = [1, 1]} : vector<32x32xbf16> to vector<8x32xbf16>
    %cst_13 = arith.constant dense<0.000000e+00> : vector<8x32xf32>
    %40 = tpu.matmul %38, %39, %cst_13 {dimension_numbers = #tpu.dot_dimension_numbers<[1], [0], [0], [1], [0, 0, 1, 1], [], []>} : vector<8x8xbf16>, vector<8x32xbf16>, vector<8x32xf32> -> vector<8x32xf32>
    %41 = arith.addf %12, %40 : vector<8x32xf32>
    %42 = vector.extract_strided_slice %4 {offsets = [0, 8], sizes = [8, 8], strides = [1, 1]} : vector<8x96xf32> to vector<8x8xf32>
    %43 = vector.shape_cast %42 : vector<8x8xf32> to vector<1x8x8xf32>
    %44 = vector.extract_strided_slice %4 {offsets = [0, 40], sizes = [8, 8], strides = [1, 1]} : vector<8x96xf32> to vector<8x8xf32>
    %45 = vector.shape_cast %44 : vector<8x8xf32> to vector<1x8x8xf32>
    %46 = vector.extract_strided_slice %4 {offsets = [0, 72], sizes = [8, 8], strides = [1, 1]} : vector<8x96xf32> to vector<8x8xf32>
    %47 = vector.shape_cast %46 : vector<8x8xf32> to vector<1x8x8xf32>
    %48 = arith.truncf %43 : vector<1x8x8xf32> to vector<1x8x8xbf16>
    %49 = arith.truncf %45 : vector<1x8x8xf32> to vector<1x8x8xbf16>
    "tpu.trace_start"() <{level = 10 : i32, message = "bqd,bkd->bqk"}> : () -> ()
    %cst_14 = arith.constant dense<0.000000e+00> : vector<1x8x8xf32>
    %50 = tpu.matmul %48, %49, %cst_14 {dimension_numbers = #tpu.dot_dimension_numbers<[2], [2], [1], [1], [0, 0, 0, 1, 1, 1], [0], [0]>} : vector<1x8x8xbf16>, vector<1x8x8xbf16>, vector<1x8x8xf32> -> vector<1x8x8xf32>
    "tpu.trace_stop"() : () -> ()
    %51 = vector.shape_cast %10 : vector<8x8xf32> to vector<1x8x8xf32>
    %52 = arith.addf %50, %51 : vector<1x8x8xf32>
    %cst_15 = arith.constant dense<0xFF800000> : vector<1x8xf32>
    %53 = vector.multi_reduction <maximumf>, %52, %cst_15 [2] : vector<1x8x8xf32> to vector<1x8xf32>
    %54 = vector.shape_cast %53 : vector<1x8xf32> to vector<1x8x1xf32>
    %55 = vector.broadcast %54 : vector<1x8x1xf32> to vector<1x8x8xf32>
    %56 = arith.subf %52, %55 : vector<1x8x8xf32>
    %57 = math.exp %56 : vector<1x8x8xf32>
    %cst_16 = arith.constant dense<0.000000e+00> : vector<1x8xf32>
    %58 = vector.multi_reduction <add>, %57, %cst_16 [2] : vector<1x8x8xf32> to vector<1x8xf32>
    %59 = vector.shape_cast %58 : vector<1x8xf32> to vector<1x8x1xf32>
    %60 = arith.truncf %57 : vector<1x8x8xf32> to vector<1x8x8xbf16>
    %61 = arith.truncf %47 : vector<1x8x8xf32> to vector<1x8x8xbf16>
    "tpu.trace_start"() <{level = 10 : i32, message = "bqk,bkd->bqd"}> : () -> ()
    %cst_17 = arith.constant dense<0.000000e+00> : vector<1x8x8xf32>
    %62 = tpu.matmul %60, %61, %cst_17 {dimension_numbers = #tpu.dot_dimension_numbers<[2], [1], [1], [2], [0, 0, 0, 1, 1, 2], [0], [0]>} : vector<1x8x8xbf16>, vector<1x8x8xbf16>, vector<1x8x8xf32> -> vector<1x8x8xf32>
    "tpu.trace_stop"() : () -> ()
    %63 = tpu.reciprocal %59 {approx = true} : vector<1x8x1xf32> -> vector<1x8x1xf32>
    %64 = vector.broadcast %63 : vector<1x8x1xf32> to vector<1x8x8xf32>
    %65 = arith.mulf %62, %64 : vector<1x8x8xf32>
    %66 = vector.shape_cast %65 : vector<1x8x8xf32> to vector<8x8xf32>
    %67 = arith.truncf %66 : vector<8x8xf32> to vector<8x8xbf16>
    %68 = vector.extract_strided_slice %11 {offsets = [8, 0], sizes = [8, 32], strides = [1, 1]} : vector<32x32xbf16> to vector<8x32xbf16>
    %cst_18 = arith.constant dense<0.000000e+00> : vector<8x32xf32>
    %69 = tpu.matmul %67, %68, %cst_18 {dimension_numbers = #tpu.dot_dimension_numbers<[1], [0], [0], [1], [0, 0, 1, 1], [], []>} : vector<8x8xbf16>, vector<8x32xbf16>, vector<8x32xf32> -> vector<8x32xf32>
    %70 = arith.addf %41, %69 : vector<8x32xf32>
    %71 = vector.extract_strided_slice %4 {offsets = [0, 16], sizes = [8, 8], strides = [1, 1]} : vector<8x96xf32> to vector<8x8xf32>
    %72 = vector.shape_cast %71 : vector<8x8xf32> to vector<1x8x8xf32>
    %73 = vector.extract_strided_slice %4 {offsets = [0, 48], sizes = [8, 8], strides = [1, 1]} : vector<8x96xf32> to vector<8x8xf32>
    %74 = vector.shape_cast %73 : vector<8x8xf32> to vector<1x8x8xf32>
    %75 = vector.extract_strided_slice %4 {offsets = [0, 80], sizes = [8, 8], strides = [1, 1]} : vector<8x96xf32> to vector<8x8xf32>
    %76 = vector.shape_cast %75 : vector<8x8xf32> to vector<1x8x8xf32>
    %77 = arith.truncf %72 : vector<1x8x8xf32> to vector<1x8x8xbf16>
    %78 = arith.truncf %74 : vector<1x8x8xf32> to vector<1x8x8xbf16>
    "tpu.trace_start"() <{level = 10 : i32, message = "bqd,bkd->bqk"}> : () -> ()
    %cst_19 = arith.constant dense<0.000000e+00> : vector<1x8x8xf32>
    %79 = tpu.matmul %77, %78, %cst_19 {dimension_numbers = #tpu.dot_dimension_numbers<[2], [2], [1], [1], [0, 0, 0, 1, 1, 1], [0], [0]>} : vector<1x8x8xbf16>, vector<1x8x8xbf16>, vector<1x8x8xf32> -> vector<1x8x8xf32>
    "tpu.trace_stop"() : () -> ()
    %80 = vector.shape_cast %10 : vector<8x8xf32> to vector<1x8x8xf32>
    %81 = arith.addf %79, %80 : vector<1x8x8xf32>
    %cst_20 = arith.constant dense<0xFF800000> : vector<1x8xf32>
    %82 = vector.multi_reduction <maximumf>, %81, %cst_20 [2] : vector<1x8x8xf32> to vector<1x8xf32>
    %83 = vector.shape_cast %82 : vector<1x8xf32> to vector<1x8x1xf32>
    %84 = vector.broadcast %83 : vector<1x8x1xf32> to vector<1x8x8xf32>
    %85 = arith.subf %81, %84 : vector<1x8x8xf32>
    %86 = math.exp %85 : vector<1x8x8xf32>
    %cst_21 = arith.constant dense<0.000000e+00> : vector<1x8xf32>
    %87 = vector.multi_reduction <add>, %86, %cst_21 [2] : vector<1x8x8xf32> to vector<1x8xf32>
    %88 = vector.shape_cast %87 : vector<1x8xf32> to vector<1x8x1xf32>
    %89 = arith.truncf %86 : vector<1x8x8xf32> to vector<1x8x8xbf16>
    %90 = arith.truncf %76 : vector<1x8x8xf32> to vector<1x8x8xbf16>
    "tpu.trace_start"() <{level = 10 : i32, message = "bqk,bkd->bqd"}> : () -> ()
    %cst_22 = arith.constant dense<0.000000e+00> : vector<1x8x8xf32>
    %91 = tpu.matmul %89, %90, %cst_22 {dimension_numbers = #tpu.dot_dimension_numbers<[2], [1], [1], [2], [0, 0, 0, 1, 1, 2], [0], [0]>} : vector<1x8x8xbf16>, vector<1x8x8xbf16>, vector<1x8x8xf32> -> vector<1x8x8xf32>
    "tpu.trace_stop"() : () -> ()
    %92 = tpu.reciprocal %88 {approx = true} : vector<1x8x1xf32> -> vector<1x8x1xf32>
    %93 = vector.broadcast %92 : vector<1x8x1xf32> to vector<1x8x8xf32>
    %94 = arith.mulf %91, %93 : vector<1x8x8xf32>
    %95 = vector.shape_cast %94 : vector<1x8x8xf32> to vector<8x8xf32>
    %96 = arith.truncf %95 : vector<8x8xf32> to vector<8x8xbf16>
    %97 = vector.extract_strided_slice %11 {offsets = [16, 0], sizes = [8, 32], strides = [1, 1]} : vector<32x32xbf16> to vector<8x32xbf16>
    %cst_23 = arith.constant dense<0.000000e+00> : vector<8x32xf32>
    %98 = tpu.matmul %96, %97, %cst_23 {dimension_numbers = #tpu.dot_dimension_numbers<[1], [0], [0], [1], [0, 0, 1, 1], [], []>} : vector<8x8xbf16>, vector<8x32xbf16>, vector<8x32xf32> -> vector<8x32xf32>
    %99 = arith.addf %70, %98 : vector<8x32xf32>
    %100 = vector.extract_strided_slice %4 {offsets = [0, 24], sizes = [8, 8], strides = [1, 1]} : vector<8x96xf32> to vector<8x8xf32>
    %101 = vector.shape_cast %100 : vector<8x8xf32> to vector<1x8x8xf32>
    %102 = vector.extract_strided_slice %4 {offsets = [0, 56], sizes = [8, 8], strides = [1, 1]} : vector<8x96xf32> to vector<8x8xf32>
    %103 = vector.shape_cast %102 : vector<8x8xf32> to vector<1x8x8xf32>
    %104 = vector.extract_strided_slice %4 {offsets = [0, 88], sizes = [8, 8], strides = [1, 1]} : vector<8x96xf32> to vector<8x8xf32>
    %105 = vector.shape_cast %104 : vector<8x8xf32> to vector<1x8x8xf32>
    %106 = arith.truncf %101 : vector<1x8x8xf32> to vector<1x8x8xbf16>
    %107 = arith.truncf %103 : vector<1x8x8xf32> to vector<1x8x8xbf16>
    "tpu.trace_start"() <{level = 10 : i32, message = "bqd,bkd->bqk"}> : () -> ()
    %cst_24 = arith.constant dense<0.000000e+00> : vector<1x8x8xf32>
    %108 = tpu.matmul %106, %107, %cst_24 {dimension_numbers = #tpu.dot_dimension_numbers<[2], [2], [1], [1], [0, 0, 0, 1, 1, 1], [0], [0]>} : vector<1x8x8xbf16>, vector<1x8x8xbf16>, vector<1x8x8xf32> -> vector<1x8x8xf32>
    "tpu.trace_stop"() : () -> ()
    %109 = vector.shape_cast %10 : vector<8x8xf32> to vector<1x8x8xf32>
    %110 = arith.addf %108, %109 : vector<1x8x8xf32>
    %cst_25 = arith.constant dense<0xFF800000> : vector<1x8xf32>
    %111 = vector.multi_reduction <maximumf>, %110, %cst_25 [2] : vector<1x8x8xf32> to vector<1x8xf32>
    %112 = vector.shape_cast %111 : vector<1x8xf32> to vector<1x8x1xf32>
    %113 = vector.broadcast %112 : vector<1x8x1xf32> to vector<1x8x8xf32>
    %114 = arith.subf %110, %113 : vector<1x8x8xf32>
    %115 = math.exp %114 : vector<1x8x8xf32>
    %cst_26 = arith.constant dense<0.000000e+00> : vector<1x8xf32>
    %116 = vector.multi_reduction <add>, %115, %cst_26 [2] : vector<1x8x8xf32> to vector<1x8xf32>
    %117 = vector.shape_cast %116 : vector<1x8xf32> to vector<1x8x1xf32>
    %118 = arith.truncf %115 : vector<1x8x8xf32> to vector<1x8x8xbf16>
    %119 = arith.truncf %105 : vector<1x8x8xf32> to vector<1x8x8xbf16>
    "tpu.trace_start"() <{level = 10 : i32, message = "bqk,bkd->bqd"}> : () -> ()
    %cst_27 = arith.constant dense<0.000000e+00> : vector<1x8x8xf32>
    %120 = tpu.matmul %118, %119, %cst_27 {dimension_numbers = #tpu.dot_dimension_numbers<[2], [1], [1], [2], [0, 0, 0, 1, 1, 2], [0], [0]>} : vector<1x8x8xbf16>, vector<1x8x8xbf16>, vector<1x8x8xf32> -> vector<1x8x8xf32>
    "tpu.trace_stop"() : () -> ()
    %121 = tpu.reciprocal %117 {approx = true} : vector<1x8x1xf32> -> vector<1x8x1xf32>
    %122 = vector.broadcast %121 : vector<1x8x1xf32> to vector<1x8x8xf32>
    %123 = arith.mulf %120, %122 : vector<1x8x8xf32>
    %124 = vector.shape_cast %123 : vector<1x8x8xf32> to vector<8x8xf32>
    %125 = arith.truncf %124 : vector<8x8xf32> to vector<8x8xbf16>
    %126 = vector.extract_strided_slice %11 {offsets = [24, 0], sizes = [8, 32], strides = [1, 1]} : vector<32x32xbf16> to vector<8x32xbf16>
    %cst_28 = arith.constant dense<0.000000e+00> : vector<8x32xf32>
    %127 = tpu.matmul %125, %126, %cst_28 {dimension_numbers = #tpu.dot_dimension_numbers<[1], [0], [0], [1], [0, 0, 1, 1], [], []>} : vector<8x8xbf16>, vector<8x32xbf16>, vector<8x32xf32> -> vector<8x32xf32>
    %128 = arith.addf %99, %127 : vector<8x32xf32>
    %c0_29 = arith.constant 0 : index
    %c0_30 = arith.constant 0 : index
    %129 = vector.load %arg4[%c0_29, %c0_30] : memref<1x32xf32, #tpu.memory_space<vmem>>, vector<1x32xf32>
    %130 = vector.broadcast %129 : vector<1x32xf32> to vector<8x32xf32>
    %131 = arith.addf %128, %130 : vector<8x32xf32>
    %132 = vector.shape_cast %131 : vector<8x32xf32> to vector<1x8x32xf32>
    %c0_31 = arith.constant 0 : index
    %c0_32 = arith.constant 0 : index
    %c0_33 = arith.constant 0 : index
    %133 = vector.load %arg5[%c0_31, %c0_32, %c0_33] : memref<1x8x32xf32, #tpu.memory_space<vmem>>, vector<1x8x32xf32>
    tpu.vector_store %arg5[%c0_31, %c0_32, %c0_33], %132 {strides = array<i32>} : memref<1x8x32xf32, #tpu.memory_space<vmem>>, vector<1x8x32xf32>,
    return
  }
  func.func @transform_0(%arg0: i32) -> (i32, i32, i32) {
    %c0_i32 = arith.constant 0 : i32
    %c0_i32_0 = arith.constant 0 : i32
    %c0_i32_1 = arith.constant 0 : i32
    return %arg0, %c0_i32, %c0_i32_0 : i32, i32, i32
  }
  func.func @transform_1(%arg0: i32) -> (i32, i32) {
    %c0_i32 = arith.constant 0 : i32
    %c0_i32_0 = arith.constant 0 : i32
    %c0_i32_1 = arith.constant 0 : i32
    return %c0_i32, %c0_i32_0 : i32, i32
  }
  func.func @transform_2(%arg0: i32) -> (i32, i32) {
    %c0_i32 = arith.constant 0 : i32
    %c0_i32_0 = arith.constant 0 : i32
    %c0_i32_1 = arith.constant 0 : i32
    return %c0_i32, %c0_i32_0 : i32, i32
  }
  func.func @transform_3(%arg0: i32) -> (i32, i32) {
    %c0_i32 = arith.constant 0 : i32
    %c0_i32_0 = arith.constant 0 : i32
    %c0_i32_1 = arith.constant 0 : i32
    return %c0_i32, %c0_i32_0 : i32, i32
  }
  func.func @transform_4(%arg0: i32) -> (i32, i32, i32) {
    %c0_i32 = arith.constant 0 : i32
    %c0_i32_0 = arith.constant 0 : i32
    %c0_i32_1 = arith.constant 0 : i32
    return %arg0, %c0_i32, %c0_i32_0 : i32, i32, i32
  }
}

</mosaic_0001>

<llo_original>
// kernel: tpu_custom_call.1
$region0: #{tpu_custom_call.1}
  #allocation0 [shape = 'u32[]', space=smem, size = 0x4, offset = 0x4, fixed_abs, tag = 'smem constant byte address 0x4 - core index']
  #allocation1 [shape = 'u32[144,128]{1,0:T(1,128)}', space=vmem, size = 0x12000, scoped, tag = 'internal scratch']
  %s0 = inlined_call_operand.hbm [shape: f32[2,8,32], index: 0, kind: input, shape index: {}]
  %s1 = inlined_call_operand.hbm [shape: bf16[32,96], index: 1, kind: input, shape index: {}]
  %s2 = inlined_call_operand.hbm [shape: bf16[32,32], index: 2, kind: input, shape index: {}]
  %s3 = inlined_call_operand.vmem [shape: f32[1,32], index: 3, kind: input, shape index: {}]
  %s4 = inlined_call_operand.hbm [shape: f32[2,8,32], index: 4, kind: output, shape index: {}]
  %s5 = sld [smem:[#allocation0]]
  $region61: #{tpu_custom_call.1} parent=0
    _
  %s7 = ssub.s32 1, %s5
  %s8 = scalar_select 0, %s7, %s5
  $region1: #{tpu_custom_call.1} parent=0
    #allocation2 [shape = 'u8[8192]{0}', space=vmem, size = 0x2000, scoped, tag = 'input window, operand 0']
    #allocation3 [shape = 's32[2]{0}', space=sflag, size = 0x8, scoped, tag = 'scoped memory for tpu_custom_call.1']
    #allocation4 [shape = 's32[2]{0}', space=sflag, size = 0x8, scoped, tag = 'scoped memory for tpu_custom_call.1']
    #allocation5 [shape = 'u8[8192]{0}', space=vmem, size = 0x2000, scoped, tag = 'input window, operand 1, single buffered']
    #allocation6 [shape = 's32[1]{0}', space=sflag, size = 0x4, scoped, tag = 'scoped memory for tpu_custom_call.1']
    #allocation7 [shape = 'u8[8192]{0}', space=vmem, size = 0x2000, scoped, tag = 'input window, operand 2, single buffered']
    #allocation8 [shape = 'u8[8192]{0}', space=vmem, size = 0x2000, scoped, tag = 'output window, operand 0']
    %9 = vsyncpa [#allocation3], 0
    %s10 = scalar_lea.sflag [#allocation3], 1
    %11 = vsyncpa %s10, 0
    %12 = vsyncpa [#allocation6], 0
    %13 = vsyncpa [#allocation4], 0
    %s14 = scalar_lea.sflag [#allocation4], 1
    %15 = vsyncpa %s14, 0
    loop: start=0, step=1, limit=4
    $region2: #{tpu_custom_call.1} parent=1 // loop_pre_header
      _
    $region3: #{tpu_custom_call.1} parent=1 // loop_header
      %s17 = sphi 0, %s21
      %p18 = scmp.ge.s32.totalorder %s17, 4
      %s27 = sphi 0, %s29
      %s30 = sphi 0, %s27
      %s31 = sphi 0, %s30
      %s47 = sphi 0, %s31
      %s51 = sphi 0, %s51
      %s53 = sphi 0, %s51
      %s54 = sphi 0, %s53
      %s68 = sphi 0, %s54
      %s72 = sphi 0, %s72
      %s74 = sphi 0, %s72
      %s75 = sphi 0, %s74
      %s89 = sphi 0, %s75
      %s93 = sphi 0, %s93
      %s95 = sphi 0, %s93
      %s96 = sphi 0, %s95
      %s110 = sphi 0, %s96
      %s116 = sphi 0, %s118
      %s119 = sphi 0, %s116
      %s120 = sphi 0, %s119
      %s136 = sphi 0, %s120
    $region4: #{tpu_custom_call.1} parent=1 // loop_header_branch
      %20 = sbr.rel (%p18) target = $region8
    $region5: #{tpu_custom_call.1} parent=1 // loop_body
      %s22 = ssub.s32 %s17, 1
      %s23 = ssub.s32 %s17, 2
      %s24 = sadd.s32 %s17, 1
      %s25 = ssub.s32 %s17, %s24
      %p26 = scmp.eq.s32.totalorder %s25, 0
      %s28 = sadd.s32 %s27, 1
      %s29 = scalar_select %p26, %s27, %s28
      %p32 = pneg %p26
      %p33 = scmp.eq.s32.totalorder %s17, 1
      %p34 = por %p32, %p33
      %p35 = scmp.ne.s32.totalorder %s27, %s30
      %p36 = scmp.eq.s32.totalorder %s17, 0
      %p37 = por %p35, %p36
      %p38 = scmp.ne.s32.totalorder %s27, %s30
      %p39 = scmp.eq.s32.totalorder %s22, 1
      %p40 = por %p38, %p39
      %p41 = scmp.ne.s32.totalorder %s30, %s31
      %p42 = scmp.eq.s32.totalorder %s22, 0
      %p43 = por %p41, %p42
      %p44 = scmp.ne.s32.totalorder %s30, %s31
      %p45 = scmp.eq.s32.totalorder %s23, 1
      %p46 = por %p44, %p45
      %p48 = scmp.ne.s32.totalorder %s31, %s47
      %p49 = scmp.eq.s32.totalorder %s23, 0
      %p50 = por %p48, %p49
      %s52 = sadd.s32 %s51, 1
      %p55 = scmp.eq.s32.totalorder %s17, 1
      %p56 = scmp.ne.s32.totalorder %s51, %s53
      %p57 = scmp.eq.s32.totalorder %s17, 0
      %p58 = por %p56, %p57
      %p59 = scmp.ne.s32.totalorder %s51, %s53
      %p60 = scmp.eq.s32.totalorder %s22, 1
      %p61 = por %p59, %p60
      %p62 = scmp.ne.s32.totalorder %s53, %s54
      %p63 = scmp.eq.s32.totalorder %s22, 0
      %p64 = por %p62, %p63
      %p65 = scmp.ne.s32.totalorder %s53, %s54
      %p66 = scmp.eq.s32.totalorder %s23, 1
      %p67 = por %p65, %p66
      %p69 = scmp.ne.s32.totalorder %s54, %s68
      %p70 = scmp.eq.s32.totalorder %s23, 0
      %p71 = por %p69, %p70
      %s73 = sadd.s32 %s72, 1
      %p76 = scmp.eq.s32.totalorder %s17, 1
      %p77 = scmp.ne.s32.totalorder %s72, %s74
      %p78 = scmp.eq.s32.totalorder %s17, 0
      %p79 = por %p77, %p78
      %p80 = scmp.ne.s32.totalorder %s72, %s74
      %p81 = scmp.eq.s32.totalorder %s22, 1
      %p82 = por %p80, %p81
      %p83 = scmp.ne.s32.totalorder %s74, %s75
      %p84 = scmp.eq.s32.totalorder %s22, 0
      %p85 = por %p83, %p84
      %p86 = scmp.ne.s32.totalorder %s74, %s75
      %p87 = scmp.eq.s32.totalorder %s23, 1
      %p88 = por %p86, %p87
      %p90 = scmp.ne.s32.totalorder %s75, %s89
      %p91 = scmp.eq.s32.totalorder %s23, 0
      %p92 = por %p90, %p91
      %s94 = sadd.s32 %s93, 1
      %p97 = scmp.eq.s32.totalorder %s17, 1
      %p98 = scmp.ne.s32.totalorder %s93, %s95
      %p99 = scmp.eq.s32.totalorder %s17, 0
      %p100 = por %p98, %p99
      %p101 = scmp.ne.s32.totalorder %s93, %s95
      %p102 = scmp.eq.s32.totalorder %s22, 1
      %p103 = por %p101, %p102
      %p104 = scmp.ne.s32.totalorder %s95, %s96
      %p105 = scmp.eq.s32.totalorder %s22, 0
      %p106 = por %p104, %p105
      %p107 = scmp.ne.s32.totalorder %s95, %s96
      %p108 = scmp.eq.s32.totalorder %s23, 1
      %p109 = por %p107, %p108
      %p111 = scmp.ne.s32.totalorder %s96, %s110
      %p112 = scmp.eq.s32.totalorder %s23, 0
      %p113 = por %p111, %p112
      %s114 = ssub.s32 %s17, %s24
      %p115 = scmp.eq.s32.totalorder %s114, 0
      %s117 = sadd.s32 %s116, 1
      %s118 = scalar_select %p115, %s116, %s117
      %p121 = pneg %p115
      %p122 = scmp.eq.s32.totalorder %s17, 1
      %p123 = por %p121, %p122
      %p124 = scmp.ne.s32.totalorder %s116, %s119
      %p125 = scmp.eq.s32.totalorder %s17, 0
      %p126 = por %p124, %p125
      %p127 = scmp.ne.s32.totalorder %s116, %s119
      %p128 = scmp.eq.s32.totalorder %s22, 1
      %p129 = por %p127, %p128
      %p130 = scmp.ne.s32.totalorder %s119, %s120
      %p131 = scmp.eq.s32.totalorder %s22, 0
      %p132 = por %p130, %p131
      %p133 = scmp.ne.s32.totalorder %s119, %s120
      %p134 = scmp.eq.s32.totalorder %s23, 1
      %p135 = por %p133, %p134
      %p137 = scmp.ne.s32.totalorder %s120, %s136
      %p138 = scmp.eq.s32.totalorder %s23, 0
      %p139 = por %p137, %p138
      %p140 = scmp.le.s32.totalorder 1, %s17
      %p141 = scmp.lt.s32.totalorder %s17, 3
      %p142 = pnand %p140, %p141
      %p143 = pneg %p142
      // Predicated region
      $region9: #{tpu_custom_call.1} parent=5 // pred_check
        _
      $region10: #{tpu_custom_call.1} parent=5 // pred_check_branch
        %145 = sbr.rel (%p142) target = $region12
      $region11: #{tpu_custom_call.1} parent=5 // pred_region
        %s146 = ssub.s32 %s17, 1
        // Predicated region
        $region13: #{tpu_custom_call.1} parent=11 // pred_check
          %p147 = pneg %p64
        $region14: #{tpu_custom_call.1} parent=11 // pred_check_branch
          %149 = sbr.rel (%p147) target = $region16
        $region15: #{tpu_custom_call.1} parent=11 // pred_region
          %s151 = ssub.s32 256, 256
          %152 = vsyncadd [#allocation6], %s151
          %s153 = sshll.u32 [#allocation5], 4
          %s154 = int_to_ptr.vmem [resolvable:$true] %s153
          %159 = dma.hbm_to_vmem [thread:$0]  %s1, 256, %s154, [#allocation6], 64, 64, 4
        $region16: #{tpu_custom_call.1} parent=11 // pred_fallthru
          _
        // Predicated region
        $region17: #{tpu_custom_call.1} parent=11 // pred_check
          %p160 = pneg %p85
        $region18: #{tpu_custom_call.1} parent=11 // pred_check_branch
          %162 = sbr.rel (%p160) target = $region20
        $region19: #{tpu_custom_call.1} parent=11 // pred_region
          %s164 = ssub.s32 256, 256
          %165 = vsyncadd [#allocation6], %s164
          %s166 = sshll.u32 [#allocation7], 4
          %s167 = int_to_ptr.vmem [resolvable:$true] %s166
          %172 = dma.hbm_to_vmem [thread:$0]  %s2, 256, %s167, [#allocation6], 64, 64, 4
        $region20: #{tpu_custom_call.1} parent=11 // pred_fallthru
          _
        // Predicated region
        $region21: #{tpu_custom_call.1} parent=11 // pred_check
          %p173 = pneg %p106
        $region22: #{tpu_custom_call.1} parent=11 // pred_check_branch
          %175 = sbr.rel (%p173) target = $region24
        $region23: #{tpu_custom_call.1} parent=11 // pred_region
          _
        $region24: #{tpu_custom_call.1} parent=11 // pred_fallthru
          _
      $region12: #{tpu_custom_call.1} parent=5 // pred_fallthru
        _
      %p176 = scmp.lt.s32.totalorder %s17, 2
      // Predicated region
      $region25: #{tpu_custom_call.1} parent=5 // pred_check
        %p177 = pneg %p176
      $region26: #{tpu_custom_call.1} parent=5 // pred_check_branch
        %179 = sbr.rel (%p177) target = $region28
      $region27: #{tpu_custom_call.1} parent=5 // pred_region
        // Predicated region
        $region29: #{tpu_custom_call.1} parent=27 // pred_check
          %p180 = pneg %p37
        $region30: #{tpu_custom_call.1} parent=27 // pred_check_branch
          %182 = sbr.rel (%p180) target = $region32
        $region31: #{tpu_custom_call.1} parent=27 // pred_region
          %s183 = sand.u32 %s27, 1
          %s184 = scalar_lea.sflag [#allocation3], %s183
          %s185 = sand.u32 %s27, 1
          %s186 = smul.addr %s185, 8
          %s187 = scalar_lea.vmem [#allocation2], %s186
          %s189 = ssub.s32 128, 128
          %190 = vsyncadd %s184, %s189
          %s191 = smul.addr %s17, 128
          %s192 = scalar_lea.hbm %s0, %s191
          %s194 = sshll.u32 %s187, 4
          %s195 = int_to_ptr.vmem [resolvable:$true] %s194
          %197 = dma.hbm_to_vmem [thread:$0]  %s192, 128, %s195, %s184
        $region32: #{tpu_custom_call.1} parent=27 // pred_fallthru
          _
      $region28: #{tpu_custom_call.1} parent=5 // pred_fallthru
        _
      %p198 = scmp.le.s32.totalorder 1, %s17
      %p199 = scmp.lt.s32.totalorder %s17, 3
      %p200 = pnand %p198, %p199
      %p201 = pneg %p200
      // Predicated region
      $region33: #{tpu_custom_call.1} parent=5 // pred_check
        _
      $region34: #{tpu_custom_call.1} parent=5 // pred_check_branch
        %203 = sbr.rel (%p200) target = $region36
      $region35: #{tpu_custom_call.1} parent=5 // pred_region
        %s204 = ssub.s32 %s17, 1
        %s205 = sand.u32 %s30, 1
        %s206 = scalar_lea.sflag [#allocation3], %s205
        %s207 = sand.u32 %s30, 1
        %s208 = smul.addr %s207, 8
        %s209 = scalar_lea.vmem [#allocation2], %s208
        // Predicated region
        $region37: #{tpu_custom_call.1} parent=35 // pred_check
          %p210 = pneg %p43
        $region38: #{tpu_custom_call.1} parent=35 // pred_check_branch
          %212 = sbr.rel (%p210) target = $region40
        $region39: #{tpu_custom_call.1} parent=35 // pred_region
          %213 = dma.done %s206, 128
        $region40: #{tpu_custom_call.1} parent=35 // pred_fallthru
          _
        // Predicated region
        $region41: #{tpu_custom_call.1} parent=35 // pred_check
          %p214 = pneg %p64
        $region42: #{tpu_custom_call.1} parent=35 // pred_check_branch
          %216 = sbr.rel (%p214) target = $region44
        $region43: #{tpu_custom_call.1} parent=35 // pred_region
          %217 = dma.done [#allocation6], 256
        $region44: #{tpu_custom_call.1} parent=35 // pred_fallthru
          _
        // Predicated region
        $region45: #{tpu_custom_call.1} parent=35 // pred_check
          %p218 = pneg %p85
        $region46: #{tpu_custom_call.1} parent=35 // pred_check_branch
          %220 = sbr.rel (%p218) target = $region48
        $region47: #{tpu_custom_call.1} parent=35 // pred_region
          %221 = dma.done [#allocation6], 256
        $region48: #{tpu_custom_call.1} parent=35 // pred_fallthru
          _
        %s222 = sand.u32 %s30, 1
        %s223 = scalar_lea.sflag [#allocation3], %s222
        %s224 = sand.u32 %s30, 1
        %s225 = smul.addr %s224, 8
        %s226 = scalar_lea.vmem [#allocation2], %s225
        %p227 = pneg %p43
        %p228 = pneg %p40
        %p229 = pneg %p64
        %p230 = pneg %p61
        %p231 = pneg %p85
        %p232 = pneg %p82
        %p233 = pneg %p106
        %p234 = pneg %p103
        %p235 = pneg %p132
        %p236 = pneg %p129
        %s237 = sand.u32 %s119, 1
        %s238 = scalar_lea.sflag [#allocation4], %s237
        %s239 = sand.u32 %s119, 1
        %s240 = smul.addr %s239, 8
        %s241 = scalar_lea.vmem [#allocation8], %s240
        %v243 = vld [vmem:[%s209] sm:$0xff]
        %v244 = vpack.c.bf16 %v243, %v243
        %v245 = vld [vmem:[#allocation5] sm:$0xf]
        %v246 = vld [vmem:[#allocation5 + $0x4] sm:$0xf]
        %v247 = vld [vmem:[#allocation5 + $0x8] sm:$0xf]
        %v248 = vld [vmem:[#allocation5 + $0xc] sm:$0xf]
        %v253 = vunpack.c.l.b16 %v245
        %v254 = vunpack.c.l.b16 %v246
        %v255 = vunpack.c.l.b16 %v247
        %v256 = vunpack.c.l.b16 %v248
        %v257 = vpack.c.b16 %v254, %v253
        %v258 = vpack.c.b16 %v256, %v255
        %vm261 = vcmask 261120
        %v263 = vsel %vm261, %v244, 0
        %265 = vmatprep.subr.bf16.mxu0 0
        %266 = vmatpush1.bf16.msra.mxu0 0
        %267 = vmatprep.subr.bf16.mxu0 0
        %268 = vmatpush1.bf16.msra.mxu0 0
        %269 = vmatprep.subr.bf16.mxu0 0
        %270 = vmatpush1.bf16.msra.mxu0 0
        %271 = vmatprep.subr.bf16.mxu0 0
        %272 = vmatpush1.bf16.msra.mxu0 0
        %273 = vmatprep.subr.bf16.mxu0 0
        %274 = vmatpush1.bf16.msra.mxu0 0
        %275 = vmatprep.subr.bf16.mxu0 0
        %276 = vmatpush1.bf16.msra.mxu0 0
        %277 = vmatprep.subr.bf16.mxu0 0
        %278 = vmatpush1.bf16.msra.mxu0 %v258
        %279 = vmatprep.subr.bf16.mxu0 0
        %280 = vmatpush1.bf16.msra.mxu0 %v257
        %281 = vmatprep.subr.bf16.mxu0 0
        %282 = vmatpush2.bf16.msra.mxu0 0
        %283 = vmatprep.subr.bf16.mxu0 0
        %284 = vmatpush2.bf16.msra.mxu0 0
        %285 = vmatprep.subr.bf16.mxu0 0
        %286 = vmatpush2.bf16.msra.mxu0 0
        %287 = vmatprep.subr.bf16.mxu0 0
        %288 = vmatpush2.bf16.msra.mxu0 0
        %289 = vmatprep.subr.bf16.mxu0 0
        %290 = vmatpush2.bf16.msra.mxu0 0
        %291 = vmatprep.subr.bf16.mxu0 0
        %292 = vmatpush2.bf16.msra.mxu0 0
        %293 = vmatprep.subr.bf16.mxu0 0
        %294 = vmatpush2.bf16.msra.mxu0 0
        %295 = vmatprep.subr.bf16.mxu0 0
        %296 = vmatpush2.bf16.msra.mxu0 0
        %297 = vmatprep.mubr.bf16.mxu0 0
        %298 = vmatmul.mubr.bf16.gmra.mxu0 %v263
        %v299 = vpop.f32.mrf.mxu0
        %v300 = vadd.f32 0.0, %v299
        %v301 = vpop.f32.mrf.mxu0
        %v302 = vpop.f32.mrf.mxu0
        %v303 = vpop.f32.mrf.mxu0
        %304 = vdwg.mxu0
        %v305 = vlaneseq
        %v306 = vshrl.u32 %v305, 7
        %v307 = vlaneseq
        %v308 = vand.u32 %v307, 127
        %vm309 = vcmp.ge.s32.totalorder %v306, %v308
        %v310 = vsel %vm309, 0.0, -1e+30
        %v311 = vld [vmem:[#allocation7] sm:$0xf]
        %v312 = vld [vmem:[#allocation7 + $0x4] sm:$0xf]
        %v313 = vld [vmem:[#allocation7 + $0x8] sm:$0xf]
        %v314 = vld [vmem:[#allocation7 + $0xc] sm:$0xf]
        %v315 = vpack.c.bf16 %v300, %v300
        %317 = vrot.lane.b32.xlu0 %v315, 96
        %v318 = vpop.permute.xlu0 %317
        %vm319 = vcmask 64512
        %v321 = vsel %vm319, %v315, 0
        %v324 = vsel %vm319, %v318, 0
        %326 = vmatprep.subr.bf16.mxu0 0
        %327 = vmatpush1.bf16.xpose.msra.mxu0 0
        %328 = vmatprep.subr.bf16.mxu0 0
        %329 = vmatpush1.bf16.xpose.msra.mxu0 0
        %330 = vmatprep.subr.bf16.mxu0 0
        %331 = vmatpush1.bf16.xpose.msra.mxu0 0
        %332 = vmatprep.subr.bf16.mxu0 0
        %333 = vmatpush1.bf16.xpose.msra.mxu0 0
        %334 = vmatprep.subr.bf16.mxu0 0
        %335 = vmatpush1.bf16.xpose.msra.mxu0 0
        %336 = vmatprep.subr.bf16.mxu0 0
        %337 = vmatpush1.bf16.xpose.msra.mxu0 0
        %338 = vmatprep.subr.bf16.mxu0 0
        %339 = vmatpush1.bf16.xpose.msra.mxu0 0
        %340 = vmatprep.subr.bf16.mxu0 0
        %341 = vmatpush1.bf16.xpose.msra.mxu0 %v324
        %342 = vmatprep.subr.bf16.mxu0 0
        %343 = vmatpush2.bf16.xpose.msra.mxu0 0
        %344 = vmatprep.subr.bf16.mxu0 0
        %345 = vmatpush2.bf16.xpose.msra.mxu0 0
        %346 = vmatprep.subr.bf16.mxu0 0
        %347 = vmatpush2.bf16.xpose.msra.mxu0 0
        %348 = vmatprep.subr.bf16.mxu0 0
        %349 = vmatpush2.bf16.xpose.msra.mxu0 0
        %350 = vmatprep.subr.bf16.mxu0 0
        %351 = vmatpush2.bf16.xpose.msra.mxu0 0
        %352 = vmatprep.subr.bf16.mxu0 0
        %353 = vmatpush2.bf16.xpose.msra.mxu0 0
        %354 = vmatprep.subr.bf16.mxu0 0
        %355 = vmatpush2.bf16.xpose.msra.mxu0 0
        %356 = vmatprep.subr.bf16.mxu0 0
        %357 = vmatpush2.bf16.xpose.msra.mxu0 0
        %358 = vmatprep.mubr.bf16.mxu0 0
        %359 = vmatmul.mubr.bf16.gmra.mxu0 %v321
        %v360 = vpop.f32.mrf.mxu0
        %v361 = vadd.f32 %v310, %v360
        %v362 = vpop.f32.mrf.mxu0
        %v363 = vpop.f32.mrf.mxu0
        %v364 = vpop.f32.mrf.mxu0
        %365 = vdwg.mxu0
        %v366 = vsel %vm319, %v361, -inf
        %367 = vmax.xlane.f32.xlu0 %v366
        %v368 = vpop.xlane.xlu0 %367
        %v369 = vsub.f32 %v361, %v368
        %v370 = vmul.f32 %v369, 1.442695
        %v371 = vpow.pop %v370
        %v372 = vsel %vm319, %v371, 0.0
        %373 = vadd.xlane.f32.xlu0 %v372
        %v374 = vpop.xlane.xlu0 %373
        %v375 = vpack.c.bf16 %v371, %v371
        %376 = vrot.lane.b32.xlu0 %v315, 64
        %v377 = vpop.permute.xlu0 %376
        %v379 = vsel %vm319, %v375, 0
        %vm381 = vcmask 1043456
        %v383 = vsel %vm381, %v377, 0
        %385 = vmatprep.subr.bf16.mxu0 0
        %386 = vmatpush1.bf16.msra.mxu0 0
        %387 = vmatprep.subr.bf16.mxu0 0
        %388 = vmatpush1.bf16.msra.mxu0 0
        %389 = vmatprep.subr.bf16.mxu0 0
        %390 = vmatpush1.bf16.msra.mxu0 0
        %391 = vmatprep.subr.bf16.mxu0 0
        %392 = vmatpush1.bf16.msra.mxu0 0
        %393 = vmatprep.subr.bf16.mxu0 0
        %394 = vmatpush1.bf16.msra.mxu0 0
        %395 = vmatprep.subr.bf16.mxu0 0
        %396 = vmatpush1.bf16.msra.mxu0 0
        %397 = vmatprep.subr.bf16.mxu0 0
        %398 = vmatpush1.bf16.msra.mxu0 0
        %399 = vmatprep.subr.bf16.mxu0 0
        %400 = vmatpush1.bf16.msra.mxu0 %v383
        %401 = vmatprep.subr.bf16.mxu0 0
        %402 = vmatpush2.bf16.msra.mxu0 0
        %403 = vmatprep.subr.bf16.mxu0 0
        %404 = vmatpush2.bf16.msra.mxu0 0
        %405 = vmatprep.subr.bf16.mxu0 0
        %406 = vmatpush2.bf16.msra.mxu0 0
        %407 = vmatprep.subr.bf16.mxu0 0
        %408 = vmatpush2.bf16.msra.mxu0 0
        %409 = vmatprep.subr.bf16.mxu0 0
        %410 = vmatpush2.bf16.msra.mxu0 0
        %411 = vmatprep.subr.bf16.mxu0 0
        %412 = vmatpush2.bf16.msra.mxu0 0
        %413 = vmatprep.subr.bf16.mxu0 0
        %414 = vmatpush2.bf16.msra.mxu0 0
        %415 = vmatprep.subr.bf16.mxu0 0
        %416 = vmatpush2.bf16.msra.mxu0 0
        %417 = vmatprep.mubr.bf16.mxu0 0
        %418 = vmatmul.mubr.bf16.gmra.mxu0 %v379
        %v419 = vpop.f32.mrf.mxu0
        %v420 = vadd.f32 0.0, %v419
        %v421 = vpop.f32.mrf.mxu0
        %v422 = vpop.f32.mrf.mxu0
        %v423 = vpop.f32.mrf.mxu0
        %424 = vdwg.mxu0
        %v425 = vrcp.pop %v374
        %v426 = vmul.f32 %v420, %v425
        %v427 = vpack.c.bf16 %v426, %v426
        %428 = vrot.lane.b32.xlu0 %v315, 120
        %v429 = vpop.permute.xlu0 %428
        %430 = vrot.lane.b32.xlu0 %v315, 88
        %v431 = vpop.permute.xlu0 %430
        %v433 = vsel %vm319, %v429, 0
        %v436 = vsel %vm319, %v431, 0
        %438 = vmatprep.subr.bf16.mxu0 0
        %439 = vmatpush1.bf16.xpose.msra.mxu0 0
        %440 = vmatprep.subr.bf16.mxu0 0
        %441 = vmatpush1.bf16.xpose.msra.mxu0 0
        %442 = vmatprep.subr.bf16.mxu0 0
        %443 = vmatpush1.bf16.xpose.msra.mxu0 0
        %444 = vmatprep.subr.bf16.mxu0 0
        %445 = vmatpush1.bf16.xpose.msra.mxu0 0
        %446 = vmatprep.subr.bf16.mxu0 0
        %447 = vmatpush1.bf16.xpose.msra.mxu0 0
        %448 = vmatprep.subr.bf16.mxu0 0
        %449 = vmatpush1.bf16.xpose.msra.mxu0 0
        %450 = vmatprep.subr.bf16.mxu0 0
        %451 = vmatpush1.bf16.xpose.msra.mxu0 0
        %452 = vmatprep.subr.bf16.mxu0 0
        %453 = vmatpush1.bf16.xpose.msra.mxu0 %v436
        %454 = vmatprep.subr.bf16.mxu0 0
        %455 = vmatpush2.bf16.xpose.msra.mxu0 0
        %456 = vmatprep.subr.bf16.mxu0 0
        %457 = vmatpush2.bf16.xpose.msra.mxu0 0
        %458 = vmatprep.subr.bf16.mxu0 0
        %459 = vmatpush2.bf16.xpose.msra.mxu0 0
        %460 = vmatprep.subr.bf16.mxu0 0
        %461 = vmatpush2.bf16.xpose.msra.mxu0 0
        %462 = vmatprep.subr.bf16.mxu0 0
        %463 = vmatpush2.bf16.xpose.msra.mxu0 0
        %464 = vmatprep.subr.bf16.mxu0 0
        %465 = vmatpush2.bf16.xpose.msra.mxu0 0
        %466 = vmatprep.subr.bf16.mxu0 0
        %467 = vmatpush2.bf16.xpose.msra.mxu0 0
        %468 = vmatprep.subr.bf16.mxu0 0
        %469 = vmatpush2.bf16.xpose.msra.mxu0 0
        %470 = vmatprep.mubr.bf16.mxu0 0
        %471 = vmatmul.mubr.bf16.gmra.mxu0 %v433
        %v472 = vpop.f32.mrf.mxu0
        %v473 = vadd.f32 %v310, %v472
        %v474 = vpop.f32.mrf.mxu0
        %v475 = vpop.f32.mrf.mxu0
        %v476 = vpop.f32.mrf.mxu0
        %477 = vdwg.mxu0
        %v478 = vsel %vm319, %v473, -inf
        %479 = vmax.xlane.f32.xlu0 %v478
        %v480 = vpop.xlane.xlu0 %479
        %v481 = vsub.f32 %v473, %v480
        %v482 = vmul.f32 %v481, 1.442695
        %v483 = vpow.pop %v482
        %v484 = vsel %vm319, %v483, 0.0
        %485 = vadd.xlane.f32.xlu0 %v484
        %v486 = vpop.xlane.xlu0 %485
        %v487 = vpack.c.bf16 %v483, %v483
        %488 = vrot.lane.b32.xlu0 %v315, 56
        %v489 = vpop.permute.xlu0 %488
        %v491 = vsel %vm319, %v487, 0
        %v494 = vsel %vm381, %v489, 0
        %496 = vmatprep.subr.bf16.mxu0 0
        %497 = vmatpush1.bf16.msra.mxu0 0
        %498 = vmatprep.subr.bf16.mxu0 0
        %499 = vmatpush1.bf16.msra.mxu0 0
        %500 = vmatprep.subr.bf16.mxu0 0
        %501 = vmatpush1.bf16.msra.mxu0 0
        %502 = vmatprep.subr.bf16.mxu0 0
        %503 = vmatpush1.bf16.msra.mxu0 0
        %504 = vmatprep.subr.bf16.mxu0 0
        %505 = vmatpush1.bf16.msra.mxu0 0
        %506 = vmatprep.subr.bf16.mxu0 0
        %507 = vmatpush1.bf16.msra.mxu0 0
        %508 = vmatprep.subr.bf16.mxu0 0
        %509 = vmatpush1.bf16.msra.mxu0 0
        %510 = vmatprep.subr.bf16.mxu0 0
        %511 = vmatpush1.bf16.msra.mxu0 %v494
        %512 = vmatprep.subr.bf16.mxu0 0
        %513 = vmatpush2.bf16.msra.mxu0 0
        %514 = vmatprep.subr.bf16.mxu0 0
        %515 = vmatpush2.bf16.msra.mxu0 0
        %516 = vmatprep.subr.bf16.mxu0 0
        %517 = vmatpush2.bf16.msra.mxu0 0
        %518 = vmatprep.subr.bf16.mxu0 0
        %519 = vmatpush2.bf16.msra.mxu0 0
        %520 = vmatprep.subr.bf16.mxu0 0
        %521 = vmatpush2.bf16.msra.mxu0 0
        %522 = vmatprep.subr.bf16.mxu0 0
        %523 = vmatpush2.bf16.msra.mxu0 0
        %524 = vmatprep.subr.bf16.mxu0 0
        %525 = vmatpush2.bf16.msra.mxu0 0
        %526 = vmatprep.subr.bf16.mxu0 0
        %527 = vmatpush2.bf16.msra.mxu0 0
        %528 = vmatprep.mubr.bf16.mxu0 0
        %529 = vmatmul.mubr.bf16.gmra.mxu0 %v491
        %v530 = vpop.f32.mrf.mxu0
        %v531 = vadd.f32 0.0, %v530
        %v532 = vpop.f32.mrf.mxu0
        %v533 = vpop.f32.mrf.mxu0
        %v534 = vpop.f32.mrf.mxu0
        %535 = vdwg.mxu0
        %v536 = vrcp.pop %v486
        %v537 = vmul.f32 %v531, %v536
        %v538 = vpack.c.bf16 %v537, %v537
        %v540 = vsel %vm319, %v538, 0
        %v543 = vsel %vm381, %v312, 0
        %545 = vmatprep.subr.bf16.mxu0 0
        %546 = vmatpush1.bf16.msra.mxu0 0
        %547 = vmatprep.subr.bf16.mxu0 0
        %548 = vmatpush1.bf16.msra.mxu0 0
        %549 = vmatprep.subr.bf16.mxu0 0
        %550 = vmatpush1.bf16.msra.mxu0 0
        %551 = vmatprep.subr.bf16.mxu0 0
        %552 = vmatpush1.bf16.msra.mxu0 0
        %553 = vmatprep.subr.bf16.mxu0 0
        %554 = vmatpush1.bf16.msra.mxu0 0
        %555 = vmatprep.subr.bf16.mxu0 0
        %556 = vmatpush1.bf16.msra.mxu0 0
        %557 = vmatprep.subr.bf16.mxu0 0
        %558 = vmatpush1.bf16.msra.mxu0 0
        %559 = vmatprep.subr.bf16.mxu0 0
        %560 = vmatpush1.bf16.msra.mxu0 %v543
        %561 = vmatprep.subr.bf16.mxu0 0
        %562 = vmatpush2.bf16.msra.mxu0 0
        %563 = vmatprep.subr.bf16.mxu0 0
        %564 = vmatpush2.bf16.msra.mxu0 0
        %565 = vmatprep.subr.bf16.mxu0 0
        %566 = vmatpush2.bf16.msra.mxu0 0
        %567 = vmatprep.subr.bf16.mxu0 0
        %568 = vmatpush2.bf16.msra.mxu0 0
        %569 = vmatprep.subr.bf16.mxu0 0
        %570 = vmatpush2.bf16.msra.mxu0 0
        %571 = vmatprep.subr.bf16.mxu0 0
        %572 = vmatpush2.bf16.msra.mxu0 0
        %573 = vmatprep.subr.bf16.mxu0 0
        %574 = vmatpush2.bf16.msra.mxu0 0
        %575 = vmatprep.subr.bf16.mxu0 0
        %576 = vmatpush2.bf16.msra.mxu0 0
        %577 = vmatprep.mubr.bf16.mxu0 0
        %578 = vmatmul.mubr.bf16.gmra.mxu0 %v540
        %v579 = vpop.f32.mrf.mxu0
        %v580 = vadd.f32 0.0, %v579
        %v581 = vpop.f32.mrf.mxu0
        %v582 = vpop.f32.mrf.mxu0
        %v583 = vpop.f32.mrf.mxu0
        %584 = vdwg.mxu0
        %v586 = vsel %vm319, %v427, 0
        %v589 = vsel %vm381, %v311, 0
        %591 = vmatprep.subr.bf16.mxu0 0
        %592 = vmatpush1.bf16.msra.mxu0 0
        %593 = vmatprep.subr.bf16.mxu0 0
        %594 = vmatpush1.bf16.msra.mxu0 0
        %595 = vmatprep.subr.bf16.mxu0 0
        %596 = vmatpush1.bf16.msra.mxu0 0
        %597 = vmatprep.subr.bf16.mxu0 0
        %598 = vmatpush1.bf16.msra.mxu0 0
        %599 = vmatprep.subr.bf16.mxu0 0
        %600 = vmatpush1.bf16.msra.mxu0 0
        %601 = vmatprep.subr.bf16.mxu0 0
        %602 = vmatpush1.bf16.msra.mxu0 0
        %603 = vmatprep.subr.bf16.mxu0 0
        %604 = vmatpush1.bf16.msra.mxu0 0
        %605 = vmatprep.subr.bf16.mxu0 0
        %606 = vmatpush1.bf16.msra.mxu0 %v589
        %607 = vmatprep.subr.bf16.mxu0 0
        %608 = vmatpush2.bf16.msra.mxu0 0
        %609 = vmatprep.subr.bf16.mxu0 0
        %610 = vmatpush2.bf16.msra.mxu0 0
        %611 = vmatprep.subr.bf16.mxu0 0
        %612 = vmatpush2.bf16.msra.mxu0 0
        %613 = vmatprep.subr.bf16.mxu0 0
        %614 = vmatpush2.bf16.msra.mxu0 0
        %615 = vmatprep.subr.bf16.mxu0 0
        %616 = vmatpush2.bf16.msra.mxu0 0
        %617 = vmatprep.subr.bf16.mxu0 0
        %618 = vmatpush2.bf16.msra.mxu0 0
        %619 = vmatprep.subr.bf16.mxu0 0
        %620 = vmatpush2.bf16.msra.mxu0 0
        %621 = vmatprep.subr.bf16.mxu0 0
        %622 = vmatpush2.bf16.msra.mxu0 0
        %623 = vmatprep.mubr.bf16.mxu0 0
        %624 = vmatmul.mubr.bf16.gmra.mxu0 %v586
        %v625 = vpop.f32.mrf.mxu0
        %v626 = vadd.f32 %v580, %v625
        %v627 = vpop.f32.mrf.mxu0
        %v628 = vpop.f32.mrf.mxu0
        %v629 = vpop.f32.mrf.mxu0
        %630 = vdwg.mxu0
        %631 = vrot.lane.b32.xlu0 %v315, 112
        %v632 = vpop.permute.xlu0 %631
        %633 = vrot.lane.b32.xlu0 %v315, 80
        %v634 = vpop.permute.xlu0 %633
        %v636 = vsel %vm319, %v632, 0
        %v639 = vsel %vm319, %v634, 0
        %641 = vmatprep.subr.bf16.mxu0 0
        %642 = vmatpush1.bf16.xpose.msra.mxu0 0
        %643 = vmatprep.subr.bf16.mxu0 0
        %644 = vmatpush1.bf16.xpose.msra.mxu0 0
        %645 = vmatprep.subr.bf16.mxu0 0
        %646 = vmatpush1.bf16.xpose.msra.mxu0 0
        %647 = vmatprep.subr.bf16.mxu0 0
        %648 = vmatpush1.bf16.xpose.msra.mxu0 0
        %649 = vmatprep.subr.bf16.mxu0 0
        %650 = vmatpush1.bf16.xpose.msra.mxu0 0
        %651 = vmatprep.subr.bf16.mxu0 0
        %652 = vmatpush1.bf16.xpose.msra.mxu0 0
        %653 = vmatprep.subr.bf16.mxu0 0
        %654 = vmatpush1.bf16.xpose.msra.mxu0 0
        %655 = vmatprep.subr.bf16.mxu0 0
        %656 = vmatpush1.bf16.xpose.msra.mxu0 %v639
        %657 = vmatprep.subr.bf16.mxu0 0
        %658 = vmatpush2.bf16.xpose.msra.mxu0 0
        %659 = vmatprep.subr.bf16.mxu0 0
        %660 = vmatpush2.bf16.xpose.msra.mxu0 0
        %661 = vmatprep.subr.bf16.mxu0 0
        %662 = vmatpush2.bf16.xpose.msra.mxu0 0
        %663 = vmatprep.subr.bf16.mxu0 0
        %664 = vmatpush2.bf16.xpose.msra.mxu0 0
        %665 = vmatprep.subr.bf16.mxu0 0
        %666 = vmatpush2.bf16.xpose.msra.mxu0 0
        %667 = vmatprep.subr.bf16.mxu0 0
        %668 = vmatpush2.bf16.xpose.msra.mxu0 0
        %669 = vmatprep.subr.bf16.mxu0 0
        %670 = vmatpush2.bf16.xpose.msra.mxu0 0
        %671 = vmatprep.subr.bf16.mxu0 0
        %672 = vmatpush2.bf16.xpose.msra.mxu0 0
        %673 = vmatprep.mubr.bf16.mxu0 0
        %674 = vmatmul.mubr.bf16.gmra.mxu0 %v636
        %v675 = vpop.f32.mrf.mxu0
        %v676 = vadd.f32 %v310, %v675
        %v677 = vpop.f32.mrf.mxu0
        %v678 = vpop.f32.mrf.mxu0
        %v679 = vpop.f32.mrf.mxu0
        %680 = vdwg.mxu0
        %v681 = vsel %vm319, %v676, -inf
        %682 = vmax.xlane.f32.xlu0 %v681
        %v683 = vpop.xlane.xlu0 %682
        %v684 = vsub.f32 %v676, %v683
        %v685 = vmul.f32 %v684, 1.442695
        %v686 = vpow.pop %v685
        %v687 = vsel %vm319, %v686, 0.0
        %688 = vadd.xlane.f32.xlu0 %v687
        %v689 = vpop.xlane.xlu0 %688
        %v690 = vpack.c.bf16 %v686, %v686
        %691 = vrot.lane.b32.xlu0 %v315, 48
        %v692 = vpop.permute.xlu0 %691
        %v694 = vsel %vm319, %v690, 0
        %v697 = vsel %vm381, %v692, 0
        %699 = vmatprep.subr.bf16.mxu0 0
        %700 = vmatpush1.bf16.msra.mxu0 0
        %701 = vmatprep.subr.bf16.mxu0 0
        %702 = vmatpush1.bf16.msra.mxu0 0
        %703 = vmatprep.subr.bf16.mxu0 0
        %704 = vmatpush1.bf16.msra.mxu0 0
        %705 = vmatprep.subr.bf16.mxu0 0
        %706 = vmatpush1.bf16.msra.mxu0 0
        %707 = vmatprep.subr.bf16.mxu0 0
        %708 = vmatpush1.bf16.msra.mxu0 0
        %709 = vmatprep.subr.bf16.mxu0 0
        %710 = vmatpush1.bf16.msra.mxu0 0
        %711 = vmatprep.subr.bf16.mxu0 0
        %712 = vmatpush1.bf16.msra.mxu0 0
        %713 = vmatprep.subr.bf16.mxu0 0
        %714 = vmatpush1.bf16.msra.mxu0 %v697
        %715 = vmatprep.subr.bf16.mxu0 0
        %716 = vmatpush2.bf16.msra.mxu0 0
        %717 = vmatprep.subr.bf16.mxu0 0
        %718 = vmatpush2.bf16.msra.mxu0 0
        %719 = vmatprep.subr.bf16.mxu0 0
        %720 = vmatpush2.bf16.msra.mxu0 0
        %721 = vmatprep.subr.bf16.mxu0 0
        %722 = vmatpush2.bf16.msra.mxu0 0
        %723 = vmatprep.subr.bf16.mxu0 0
        %724 = vmatpush2.bf16.msra.mxu0 0
        %725 = vmatprep.subr.bf16.mxu0 0
        %726 = vmatpush2.bf16.msra.mxu0 0
        %727 = vmatprep.subr.bf16.mxu0 0
        %728 = vmatpush2.bf16.msra.mxu0 0
        %729 = vmatprep.subr.bf16.mxu0 0
        %730 = vmatpush2.bf16.msra.mxu0 0
        %731 = vmatprep.mubr.bf16.mxu0 0
        %732 = vmatmul.mubr.bf16.gmra.mxu0 %v694
        %v733 = vpop.f32.mrf.mxu0
        %v734 = vadd.f32 0.0, %v733
        %v735 = vpop.f32.mrf.mxu0
        %v736 = vpop.f32.mrf.mxu0
        %v737 = vpop.f32.mrf.mxu0
        %738 = vdwg.mxu0
        %v739 = vrcp.pop %v689
        %v740 = vmul.f32 %v734, %v739
        %v741 = vpack.c.bf16 %v740, %v740
        %v743 = vsel %vm319, %v741, 0
        %v746 = vsel %vm381, %v313, 0
        %748 = vmatprep.subr.bf16.mxu0 0
        %749 = vmatpush1.bf16.msra.mxu0 0
        %750 = vmatprep.subr.bf16.mxu0 0
        %751 = vmatpush1.bf16.msra.mxu0 0
        %752 = vmatprep.subr.bf16.mxu0 0
        %753 = vmatpush1.bf16.msra.mxu0 0
        %754 = vmatprep.subr.bf16.mxu0 0
        %755 = vmatpush1.bf16.msra.mxu0 0
        %756 = vmatprep.subr.bf16.mxu0 0
        %757 = vmatpush1.bf16.msra.mxu0 0
        %758 = vmatprep.subr.bf16.mxu0 0
        %759 = vmatpush1.bf16.msra.mxu0 0
        %760 = vmatprep.subr.bf16.mxu0 0
        %761 = vmatpush1.bf16.msra.mxu0 0
        %762 = vmatprep.subr.bf16.mxu0 0
        %763 = vmatpush1.bf16.msra.mxu0 %v746
        %764 = vmatprep.subr.bf16.mxu0 0
        %765 = vmatpush2.bf16.msra.mxu0 0
        %766 = vmatprep.subr.bf16.mxu0 0
        %767 = vmatpush2.bf16.msra.mxu0 0
        %768 = vmatprep.subr.bf16.mxu0 0
        %769 = vmatpush2.bf16.msra.mxu0 0
        %770 = vmatprep.subr.bf16.mxu0 0
        %771 = vmatpush2.bf16.msra.mxu0 0
        %772 = vmatprep.subr.bf16.mxu0 0
        %773 = vmatpush2.bf16.msra.mxu0 0
        %774 = vmatprep.subr.bf16.mxu0 0
        %775 = vmatpush2.bf16.msra.mxu0 0
        %776 = vmatprep.subr.bf16.mxu0 0
        %777 = vmatpush2.bf16.msra.mxu0 0
        %778 = vmatprep.subr.bf16.mxu0 0
        %779 = vmatpush2.bf16.msra.mxu0 0
        %780 = vmatprep.mubr.bf16.mxu0 0
        %781 = vmatmul.mubr.bf16.gmra.mxu0 %v743
        %v782 = vpop.f32.mrf.mxu0
        %v783 = vadd.f32 0.0, %v782
        %v784 = vpop.f32.mrf.mxu0
        %v785 = vpop.f32.mrf.mxu0
        %v786 = vpop.f32.mrf.mxu0
        %787 = vdwg.mxu0
        %v788 = vadd.f32 %v626, %v783
        %789 = vrot.lane.b32.xlu0 %v315, 104
        %v790 = vpop.permute.xlu0 %789
        %791 = vrot.lane.b32.xlu0 %v315, 72
        %v792 = vpop.permute.xlu0 %791
        %v794 = vsel %vm319, %v790, 0
        %v797 = vsel %vm319, %v792, 0
        %799 = vmatprep.subr.bf16.mxu0 0
        %800 = vmatpush1.bf16.xpose.msra.mxu0 0
        %801 = vmatprep.subr.bf16.mxu0 0
        %802 = vmatpush1.bf16.xpose.msra.mxu0 0
        %803 = vmatprep.subr.bf16.mxu0 0
        %804 = vmatpush1.bf16.xpose.msra.mxu0 0
        %805 = vmatprep.subr.bf16.mxu0 0
        %806 = vmatpush1.bf16.xpose.msra.mxu0 0
        %807 = vmatprep.subr.bf16.mxu0 0
        %808 = vmatpush1.bf16.xpose.msra.mxu0 0
        %809 = vmatprep.subr.bf16.mxu0 0
        %810 = vmatpush1.bf16.xpose.msra.mxu0 0
        %811 = vmatprep.subr.bf16.mxu0 0
        %812 = vmatpush1.bf16.xpose.msra.mxu0 0
        %813 = vmatprep.subr.bf16.mxu0 0
        %814 = vmatpush1.bf16.xpose.msra.mxu0 %v797
        %815 = vmatprep.subr.bf16.mxu0 0
        %816 = vmatpush2.bf16.xpose.msra.mxu0 0
        %817 = vmatprep.subr.bf16.mxu0 0
        %818 = vmatpush2.bf16.xpose.msra.mxu0 0
        %819 = vmatprep.subr.bf16.mxu0 0
        %820 = vmatpush2.bf16.xpose.msra.mxu0 0
        %821 = vmatprep.subr.bf16.mxu0 0
        %822 = vmatpush2.bf16.xpose.msra.mxu0 0
        %823 = vmatprep.subr.bf16.mxu0 0
        %824 = vmatpush2.bf16.xpose.msra.mxu0 0
        %825 = vmatprep.subr.bf16.mxu0 0
        %826 = vmatpush2.bf16.xpose.msra.mxu0 0
        %827 = vmatprep.subr.bf16.mxu0 0
        %828 = vmatpush2.bf16.xpose.msra.mxu0 0
        %829 = vmatprep.subr.bf16.mxu0 0
        %830 = vmatpush2.bf16.xpose.msra.mxu0 0
        %831 = vmatprep.mubr.bf16.mxu0 0
        %832 = vmatmul.mubr.bf16.gmra.mxu0 %v794
        %v833 = vpop.f32.mrf.mxu0
        %v834 = vadd.f32 %v310, %v833
        %v835 = vpop.f32.mrf.mxu0
        %v836 = vpop.f32.mrf.mxu0
        %v837 = vpop.f32.mrf.mxu0
        %838 = vdwg.mxu0
        %v839 = vsel %vm319, %v834, -inf
        %840 = vmax.xlane.f32.xlu0 %v839
        %v841 = vpop.xlane.xlu0 %840
        %v842 = vsub.f32 %v834, %v841
        %v843 = vmul.f32 %v842, 1.442695
        %v844 = vpow.pop %v843
        %v845 = vsel %vm319, %v844, 0.0
        %846 = vadd.xlane.f32.xlu0 %v845
        %v847 = vpop.xlane.xlu0 %846
        %v848 = vpack.c.bf16 %v844, %v844
        %849 = vrot.lane.b32.xlu0 %v315, 40
        %v850 = vpop.permute.xlu0 %849
        %v852 = vsel %vm319, %v848, 0
        %v855 = vsel %vm381, %v850, 0
        %857 = vmatprep.subr.bf16.mxu0 0
        %858 = vmatpush1.bf16.msra.mxu0 0
        %859 = vmatprep.subr.bf16.mxu0 0
        %860 = vmatpush1.bf16.msra.mxu0 0
        %861 = vmatprep.subr.bf16.mxu0 0
        %862 = vmatpush1.bf16.msra.mxu0 0
        %863 = vmatprep.subr.bf16.mxu0 0
        %864 = vmatpush1.bf16.msra.mxu0 0
        %865 = vmatprep.subr.bf16.mxu0 0
        %866 = vmatpush1.bf16.msra.mxu0 0
        %867 = vmatprep.subr.bf16.mxu0 0
        %868 = vmatpush1.bf16.msra.mxu0 0
        %869 = vmatprep.subr.bf16.mxu0 0
        %870 = vmatpush1.bf16.msra.mxu0 0
        %871 = vmatprep.subr.bf16.mxu0 0
        %872 = vmatpush1.bf16.msra.mxu0 %v855
        %873 = vmatprep.subr.bf16.mxu0 0
        %874 = vmatpush2.bf16.msra.mxu0 0
        %875 = vmatprep.subr.bf16.mxu0 0
        %876 = vmatpush2.bf16.msra.mxu0 0
        %877 = vmatprep.subr.bf16.mxu0 0
        %878 = vmatpush2.bf16.msra.mxu0 0
        %879 = vmatprep.subr.bf16.mxu0 0
        %880 = vmatpush2.bf16.msra.mxu0 0
        %881 = vmatprep.subr.bf16.mxu0 0
        %882 = vmatpush2.bf16.msra.mxu0 0
        %883 = vmatprep.subr.bf16.mxu0 0
        %884 = vmatpush2.bf16.msra.mxu0 0
        %885 = vmatprep.subr.bf16.mxu0 0
        %886 = vmatpush2.bf16.msra.mxu0 0
        %887 = vmatprep.subr.bf16.mxu0 0
        %888 = vmatpush2.bf16.msra.mxu0 0
        %889 = vmatprep.mubr.bf16.mxu0 0
        %890 = vmatmul.mubr.bf16.gmra.mxu0 %v852
        %v891 = vpop.f32.mrf.mxu0
        %v892 = vadd.f32 0.0, %v891
        %v893 = vpop.f32.mrf.mxu0
        %v894 = vpop.f32.mrf.mxu0
        %v895 = vpop.f32.mrf.mxu0
        %896 = vdwg.mxu0
        %v897 = vrcp.pop %v847
        %v898 = vmul.f32 %v892, %v897
        %v899 = vpack.c.bf16 %v898, %v898
        %v901 = vsel %vm319, %v899, 0
        %v904 = vsel %vm381, %v314, 0
        %906 = vmatprep.subr.bf16.mxu0 0
        %907 = vmatpush1.bf16.msra.mxu0 0
        %908 = vmatprep.subr.bf16.mxu0 0
        %909 = vmatpush1.bf16.msra.mxu0 0
        %910 = vmatprep.subr.bf16.mxu0 0
        %911 = vmatpush1.bf16.msra.mxu0 0
        %912 = vmatprep.subr.bf16.mxu0 0
        %913 = vmatpush1.bf16.msra.mxu0 0
        %914 = vmatprep.subr.bf16.mxu0 0
        %915 = vmatpush1.bf16.msra.mxu0 0
        %916 = vmatprep.subr.bf16.mxu0 0
        %917 = vmatpush1.bf16.msra.mxu0 0
        %918 = vmatprep.subr.bf16.mxu0 0
        %919 = vmatpush1.bf16.msra.mxu0 0
        %920 = vmatprep.subr.bf16.mxu0 0
        %921 = vmatpush1.bf16.msra.mxu0 %v904
        %922 = vmatprep.subr.bf16.mxu0 0
        %923 = vmatpush2.bf16.msra.mxu0 0
        %924 = vmatprep.subr.bf16.mxu0 0
        %925 = vmatpush2.bf16.msra.mxu0 0
        %926 = vmatprep.subr.bf16.mxu0 0
        %927 = vmatpush2.bf16.msra.mxu0 0
        %928 = vmatprep.subr.bf16.mxu0 0
        %929 = vmatpush2.bf16.msra.mxu0 0
        %930 = vmatprep.subr.bf16.mxu0 0
        %931 = vmatpush2.bf16.msra.mxu0 0
        %932 = vmatprep.subr.bf16.mxu0 0
        %933 = vmatpush2.bf16.msra.mxu0 0
        %934 = vmatprep.subr.bf16.mxu0 0
        %935 = vmatpush2.bf16.msra.mxu0 0
        %936 = vmatprep.subr.bf16.mxu0 0
        %937 = vmatpush2.bf16.msra.mxu0 0
        %938 = vmatprep.mubr.bf16.mxu0 0
        %939 = vmatmul.mubr.bf16.gmra.mxu0 %v901
        %v940 = vpop.f32.mrf.mxu0
        %v941 = vadd.f32 0.0, %v940
        %v942 = vpop.f32.mrf.mxu0
        %v943 = vpop.f32.mrf.mxu0
        %v944 = vpop.f32.mrf.mxu0
        %945 = vdwg.mxu0
        %v946 = vadd.f32 %v788, %v941
        %v947 = vld [vmem:[%s3] sm:$0x1]
        %v949 = vlaneseq
        %v950 = vshrl.u32 %v949, 7
        %v951 = vsub.s32 0, %v950
        %v952 = vrot.slane %v947, %v951
        %v954 = vadd.f32 %v946, %v952
        %955 = vst.msk [vmem:[%s241] sm:$0xff] %vm261, %v954
        %s956 = sand.u32 %s119, 1
        %s957 = scalar_lea.sflag [#allocation4], %s956
        %s958 = sand.u32 %s119, 1
        %s959 = smul.addr %s958, 8
        %s960 = scalar_lea.vmem [#allocation8], %s959
        // Predicated region
        $region49: #{tpu_custom_call.1} parent=35 // pred_check
          %p961 = pneg %p129
        $region50: #{tpu_custom_call.1} parent=35 // pred_check_branch
          %963 = sbr.rel (%p961) target = $region52
        $region51: #{tpu_custom_call.1} parent=35 // pred_region
          %s965 = ssub.s32 128, 128
          %966 = vsyncadd %s957, %s965
          %s967 = smul.addr %s22, 128
          %s968 = scalar_lea.hbm %s4, %s967
          %s970 = sshll.u32 %s960, 4
          %s971 = int_to_ptr.vmem [resolvable:$true] %s970
          %973 = dma.vmem_to_hbm [thread:$0]  %s971, 128, %s968, %s957
        $region52: #{tpu_custom_call.1} parent=35 // pred_fallthru
          _
      $region36: #{tpu_custom_call.1} parent=5 // pred_fallthru
        _
      %p974 = scmp.le.s32.totalorder 2, %s17
      // Predicated region
      $region53: #{tpu_custom_call.1} parent=5 // pred_check
        %p975 = pneg %p974
      $region54: #{tpu_custom_call.1} parent=5 // pred_check_branch
        %977 = sbr.rel (%p975) target = $region56
      $region55: #{tpu_custom_call.1} parent=5 // pred_region
        %s978 = ssub.s32 %s17, 2
        // Predicated region
        $region57: #{tpu_custom_call.1} parent=55 // pred_check
          %p979 = pneg %p135
        $region58: #{tpu_custom_call.1} parent=55 // pred_check_branch
          %981 = sbr.rel (%p979) target = $region60
        $region59: #{tpu_custom_call.1} parent=55 // pred_region
          %s982 = sand.u32 %s120, 1
          %s983 = scalar_lea.sflag [#allocation4], %s982
          %s984 = sand.u32 %s120, 1
          %s985 = smul.addr %s984, 8
          %s986 = scalar_lea.vmem [#allocation8], %s985
          %987 = dma.done %s983, 128
        $region60: #{tpu_custom_call.1} parent=55 // pred_fallthru
          _
      $region56: #{tpu_custom_call.1} parent=5 // pred_fallthru
        _
    $region6: #{tpu_custom_call.1} parent=1 // loop_footer
      %s21 = sadd.s32 1, %s17
    $region7: #{tpu_custom_call.1} parent=1 // loop_footer_branch
      %16 = sbr.rel target = $region3
    $region8: #{tpu_custom_call.1} parent=1 // loop_exit
      _
    %988 = vsyncpa [#allocation3], 1
    %s989 = scalar_lea.sflag [#allocation3], 1
    %990 = vsyncpa %s989, 1
    %991 = vsyncpa [#allocation6], 1
    %992 = vsyncpa [#allocation4], 1
    %s993 = scalar_lea.sflag [#allocation4], 1
    %994 = vsyncpa %s993, 1

// kernel: tpu_custom_call.1
$region0: #{tpu_custom_call.1}
  #allocation0 [shape = 'u32[]', space=smem, size = 0x4, offset = 0x4, fixed_abs, tag = 'smem constant byte address 0x4 - core index']
  #allocation1 [shape = 'u32[144,128]{1,0:T(1,128)}', space=vmem, size = 0x12000, scoped, tag = 'internal scratch']
  %s0 = inlined_call_operand.hbm [shape: f32[2,8,32], index: 0, kind: input, shape index: {}]
  %s1 = inlined_call_operand.hbm [shape: bf16[32,96], index: 1, kind: input, shape index: {}]
  %s2 = inlined_call_operand.hbm [shape: bf16[32,32], index: 2, kind: input, shape index: {}]
  %s3 = inlined_call_operand.vmem [shape: f32[1,32], index: 3, kind: input, shape index: {}]
  %s4 = inlined_call_operand.hbm [shape: f32[2,8,32], index: 4, kind: output, shape index: {}]
  %s5 = sld [smem:[#allocation0]]
  $region61: #{tpu_custom_call.1} parent=0
    _
  %s7 = ssub.s32 1, %s5
  %s8 = scalar_select 0, %s7, %s5
  $region1: #{tpu_custom_call.1} parent=0
    #allocation2 [shape = 'u8[8192]{0}', space=vmem, size = 0x2000, scoped, tag = 'input window, operand 0']
    #allocation3 [shape = 's32[2]{0}', space=sflag, size = 0x8, scoped, tag = 'scoped memory for tpu_custom_call.1']
    #allocation4 [shape = 's32[2]{0}', space=sflag, size = 0x8, scoped, tag = 'scoped memory for tpu_custom_call.1']
    #allocation5 [shape = 'u8[8192]{0}', space=vmem, size = 0x2000, scoped, tag = 'input window, operand 1, single buffered']
    #allocation6 [shape = 's32[1]{0}', space=sflag, size = 0x4, scoped, tag = 'scoped memory for tpu_custom_call.1']
    #allocation7 [shape = 'u8[8192]{0}', space=vmem, size = 0x2000, scoped, tag = 'input window, operand 2, single buffered']
    #allocation8 [shape = 'u8[8192]{0}', space=vmem, size = 0x2000, scoped, tag = 'output window, operand 0']
    %9 = vsyncpa [#allocation3], 0
    %s10 = scalar_lea.sflag [#allocation3], 1
    %11 = vsyncpa %s10, 0
    %12 = vsyncpa [#allocation6], 0
    %13 = vsyncpa [#allocation4], 0
    %s14 = scalar_lea.sflag [#allocation4], 1
    %15 = vsyncpa %s14, 0
    loop: start=0, step=1, limit=4
    $region2: #{tpu_custom_call.1} parent=1 // loop_pre_header
      _
    $region3: #{tpu_custom_call.1} parent=1 // loop_header
      %s17 = sphi 0, %s21
      %p18 = scmp.ge.s32.totalorder %s17, 4
      %s27 = sphi 0, %s29
      %s30 = sphi 0, %s27
      %s31 = sphi 0, %s30
      %s47 = sphi 0, %s31
      %s51 = sphi 0, %s51
      %s53 = sphi 0, %s51
      %s54 = sphi 0, %s53
      %s68 = sphi 0, %s54
      %s72 = sphi 0, %s72
      %s74 = sphi 0, %s72
      %s75 = sphi 0, %s74
      %s89 = sphi 0, %s75
      %s93 = sphi 0, %s93
      %s95 = sphi 0, %s93
      %s96 = sphi 0, %s95
      %s110 = sphi 0, %s96
      %s116 = sphi 0, %s118
      %s119 = sphi 0, %s116
      %s120 = sphi 0, %s119
      %s136 = sphi 0, %s120
    $region4: #{tpu_custom_call.1} parent=1 // loop_header_branch
      %20 = sbr.rel (%p18) target = $region8
    $region5: #{tpu_custom_call.1} parent=1 // loop_body
      %s22 = ssub.s32 %s17, 1
      %s23 = ssub.s32 %s17, 2
      %s24 = sadd.s32 %s17, 1
      %s25 = ssub.s32 %s17, %s24
      %p26 = scmp.eq.s32.totalorder %s25, 0
      %s28 = sadd.s32 %s27, 1
      %s29 = scalar_select %p26, %s27, %s28
      %p32 = pneg %p26
      %p33 = scmp.eq.s32.totalorder %s17, 1
      %p34 = por %p32, %p33
      %p35 = scmp.ne.s32.totalorder %s27, %s30
      %p36 = scmp.eq.s32.totalorder %s17, 0
      %p37 = por %p35, %p36
      %p38 = scmp.ne.s32.totalorder %s27, %s30
      %p39 = scmp.eq.s32.totalorder %s22, 1
      %p40 = por %p38, %p39
      %p41 = scmp.ne.s32.totalorder %s30, %s31
      %p42 = scmp.eq.s32.totalorder %s22, 0
      %p43 = por %p41, %p42
      %p44 = scmp.ne.s32.totalorder %s30, %s31
      %p45 = scmp.eq.s32.totalorder %s23, 1
      %p46 = por %p44, %p45
      %p48 = scmp.ne.s32.totalorder %s31, %s47
      %p49 = scmp.eq.s32.totalorder %s23, 0
      %p50 = por %p48, %p49
      %s52 = sadd.s32 %s51, 1
      %p55 = scmp.eq.s32.totalorder %s17, 1
      %p56 = scmp.ne.s32.totalorder %s51, %s53
      %p57 = scmp.eq.s32.totalorder %s17, 0
      %p58 = por %p56, %p57
      %p59 = scmp.ne.s32.totalorder %s51, %s53
      %p60 = scmp.eq.s32.totalorder %s22, 1
      %p61 = por %p59, %p60
      %p62 = scmp.ne.s32.totalorder %s53, %s54
      %p63 = scmp.eq.s32.totalorder %s22, 0
      %p64 = por %p62, %p63
      %p65 = scmp.ne.s32.totalorder %s53, %s54
      %p66 = scmp.eq.s32.totalorder %s23, 1
      %p67 = por %p65, %p66
      %p69 = scmp.ne.s32.totalorder %s54, %s68
      %p70 = scmp.eq.s32.totalorder %s23, 0
      %p71 = por %p69, %p70
      %s73 = sadd.s32 %s72, 1
      %p76 = scmp.eq.s32.totalorder %s17, 1
      %p77 = scmp.ne.s32.totalorder %s72, %s74
      %p78 = scmp.eq.s32.totalorder %s17, 0
      %p79 = por %p77, %p78
      %p80 = scmp.ne.s32.totalorder %s72, %s74
      %p81 = scmp.eq.s32.totalorder %s22, 1
      %p82 = por %p80, %p81
      %p83 = scmp.ne.s32.totalorder %s74, %s75
      %p84 = scmp.eq.s32.totalorder %s22, 0
      %p85 = por %p83, %p84
      %p86 = scmp.ne.s32.totalorder %s74, %s75
      %p87 = scmp.eq.s32.totalorder %s23, 1
      %p88 = por %p86, %p87
      %p90 = scmp.ne.s32.totalorder %s75, %s89
      %p91 = scmp.eq.s32.totalorder %s23, 0
      %p92 = por %p90, %p91
      %s94 = sadd.s32 %s93, 1
      %p97 = scmp.eq.s32.totalorder %s17, 1
      %p98 = scmp.ne.s32.totalorder %s93, %s95
      %p99 = scmp.eq.s32.totalorder %s17, 0
      %p100 = por %p98, %p99
      %p101 = scmp.ne.s32.totalorder %s93, %s95
      %p102 = scmp.eq.s32.totalorder %s22, 1
      %p103 = por %p101, %p102
      %p104 = scmp.ne.s32.totalorder %s95, %s96
      %p105 = scmp.eq.s32.totalorder %s22, 0
      %p106 = por %p104, %p105
      %p107 = scmp.ne.s32.totalorder %s95, %s96
      %p108 = scmp.eq.s32.totalorder %s23, 1
      %p109 = por %p107, %p108
      %p111 = scmp.ne.s32.totalorder %s96, %s110
      %p112 = scmp.eq.s32.totalorder %s23, 0
      %p113 = por %p111, %p112
      %s114 = ssub.s32 %s17, %s24
      %p115 = scmp.eq.s32.totalorder %s114, 0
      %s117 = sadd.s32 %s116, 1
      %s118 = scalar_select %p115, %s116, %s117
      %p121 = pneg %p115
      %p122 = scmp.eq.s32.totalorder %s17, 1
      %p123 = por %p121, %p122
      %p124 = scmp.ne.s32.totalorder %s116, %s119
      %p125 = scmp.eq.s32.totalorder %s17, 0
      %p126 = por %p124, %p125
      %p127 = scmp.ne.s32.totalorder %s116, %s119
      %p128 = scmp.eq.s32.totalorder %s22, 1
      %p129 = por %p127, %p128
      %p130 = scmp.ne.s32.totalorder %s119, %s120
      %p131 = scmp.eq.s32.totalorder %s22, 0
      %p132 = por %p130, %p131
      %p133 = scmp.ne.s32.totalorder %s119, %s120
      %p134 = scmp.eq.s32.totalorder %s23, 1
      %p135 = por %p133, %p134
      %p137 = scmp.ne.s32.totalorder %s120, %s136
      %p138 = scmp.eq.s32.totalorder %s23, 0
      %p139 = por %p137, %p138
      %p140 = scmp.le.s32.totalorder 1, %s17
      %p141 = scmp.lt.s32.totalorder %s17, 3
      %p142 = pnand %p140, %p141
      %p143 = pneg %p142
      // Predicated region
      $region9: #{tpu_custom_call.1} parent=5 // pred_check
        _
      $region10: #{tpu_custom_call.1} parent=5 // pred_check_branch
        %145 = sbr.rel (%p142) target = $region12
      $region11: #{tpu_custom_call.1} parent=5 // pred_region
        %s146 = ssub.s32 %s17, 1
        // Predicated region
        $region13: #{tpu_custom_call.1} parent=11 // pred_check
          %p147 = pneg %p64
        $region14: #{tpu_custom_call.1} parent=11 // pred_check_branch
          %149 = sbr.rel (%p147) target = $region16
        $region15: #{tpu_custom_call.1} parent=11 // pred_region
          %s151 = ssub.s32 256, 256
          %152 = vsyncadd [#allocation6], %s151
          %s153 = sshll.u32 [#allocation5], 4
          %s154 = int_to_ptr.vmem [resolvable:$true] %s153
          %159 = dma.hbm_to_vmem [thread:$0]  %s1, 256, %s154, [#allocation6], 64, 64, 4
        $region16: #{tpu_custom_call.1} parent=11 // pred_fallthru
          _
        // Predicated region
        $region17: #{tpu_custom_call.1} parent=11 // pred_check
          %p160 = pneg %p85
        $region18: #{tpu_custom_call.1} parent=11 // pred_check_branch
          %162 = sbr.rel (%p160) target = $region20
        $region19: #{tpu_custom_call.1} parent=11 // pred_region
          %s164 = ssub.s32 256, 256
          %165 = vsyncadd [#allocation6], %s164
          %s166 = sshll.u32 [#allocation7], 4
          %s167 = int_to_ptr.vmem [resolvable:$true] %s166
          %172 = dma.hbm_to_vmem [thread:$0]  %s2, 256, %s167, [#allocation6], 64, 64, 4
        $region20: #{tpu_custom_call.1} parent=11 // pred_fallthru
          _
        // Predicated region
        $region21: #{tpu_custom_call.1} parent=11 // pred_check
          %p173 = pneg %p106
        $region22: #{tpu_custom_call.1} parent=11 // pred_check_branch
          %175 = sbr.rel (%p173) target = $region24
        $region23: #{tpu_custom_call.1} parent=11 // pred_region
          _
        $region24: #{tpu_custom_call.1} parent=11 // pred_fallthru
          _
      $region12: #{tpu_custom_call.1} parent=5 // pred_fallthru
        _
      %p176 = scmp.lt.s32.totalorder %s17, 2
      // Predicated region
      $region25: #{tpu_custom_call.1} parent=5 // pred_check
        %p177 = pneg %p176
      $region26: #{tpu_custom_call.1} parent=5 // pred_check_branch
        %179 = sbr.rel (%p177) target = $region28
      $region27: #{tpu_custom_call.1} parent=5 // pred_region
        // Predicated region
        $region29: #{tpu_custom_call.1} parent=27 // pred_check
          %p180 = pneg %p37
        $region30: #{tpu_custom_call.1} parent=27 // pred_check_branch
          %182 = sbr.rel (%p180) target = $region32
        $region31: #{tpu_custom_call.1} parent=27 // pred_region
          %s183 = sand.u32 %s27, 1
          %s184 = scalar_lea.sflag [#allocation3], %s183
          %s185 = sand.u32 %s27, 1
          %s186 = smul.addr %s185, 8
          %s187 = scalar_lea.vmem [#allocation2], %s186
          %s189 = ssub.s32 128, 128
          %190 = vsyncadd %s184, %s189
          %s191 = smul.addr %s17, 128
          %s192 = scalar_lea.hbm %s0, %s191
          %s194 = sshll.u32 %s187, 4
          %s195 = int_to_ptr.vmem [resolvable:$true] %s194
          %197 = dma.hbm_to_vmem [thread:$0]  %s192, 128, %s195, %s184
        $region32: #{tpu_custom_call.1} parent=27 // pred_fallthru
          _
      $region28: #{tpu_custom_call.1} parent=5 // pred_fallthru
        _
      %p198 = scmp.le.s32.totalorder 1, %s17
      %p199 = scmp.lt.s32.totalorder %s17, 3
      %p200 = pnand %p198, %p199
      %p201 = pneg %p200
      // Predicated region
      $region33: #{tpu_custom_call.1} parent=5 // pred_check
        _
      $region34: #{tpu_custom_call.1} parent=5 // pred_check_branch
        %203 = sbr.rel (%p200) target = $region36
      $region35: #{tpu_custom_call.1} parent=5 // pred_region
        %s204 = ssub.s32 %s17, 1
        %s205 = sand.u32 %s30, 1
        %s206 = scalar_lea.sflag [#allocation3], %s205
        %s207 = sand.u32 %s30, 1
        %s208 = smul.addr %s207, 8
        %s209 = scalar_lea.vmem [#allocation2], %s208
        // Predicated region
        $region37: #{tpu_custom_call.1} parent=35 // pred_check
          %p210 = pneg %p43
        $region38: #{tpu_custom_call.1} parent=35 // pred_check_branch
          %212 = sbr.rel (%p210) target = $region40
        $region39: #{tpu_custom_call.1} parent=35 // pred_region
          %213 = dma.done %s206, 128
        $region40: #{tpu_custom_call.1} parent=35 // pred_fallthru
          _
        // Predicated region
        $region41: #{tpu_custom_call.1} parent=35 // pred_check
          %p214 = pneg %p64
        $region42: #{tpu_custom_call.1} parent=35 // pred_check_branch
          %216 = sbr.rel (%p214) target = $region44
        $region43: #{tpu_custom_call.1} parent=35 // pred_region
          %217 = dma.done [#allocation6], 256
        $region44: #{tpu_custom_call.1} parent=35 // pred_fallthru
          _
        // Predicated region
        $region45: #{tpu_custom_call.1} parent=35 // pred_check
          %p218 = pneg %p85
        $region46: #{tpu_custom_call.1} parent=35 // pred_check_branch
          %220 = sbr.rel (%p218) target = $region48
        $region47: #{tpu_custom_call.1} parent=35 // pred_region
          %221 = dma.done [#allocation6], 256
        $region48: #{tpu_custom_call.1} parent=35 // pred_fallthru
          _
        %s222 = sand.u32 %s30, 1
        %s223 = scalar_lea.sflag [#allocation3], %s222
        %s224 = sand.u32 %s30, 1
        %s225 = smul.addr %s224, 8
        %s226 = scalar_lea.vmem [#allocation2], %s225
        %p227 = pneg %p43
        %p228 = pneg %p40
        %p229 = pneg %p64
        %p230 = pneg %p61
        %p231 = pneg %p85
        %p232 = pneg %p82
        %p233 = pneg %p106
        %p234 = pneg %p103
        %p235 = pneg %p132
        %p236 = pneg %p129
        %s237 = sand.u32 %s119, 1
        %s238 = scalar_lea.sflag [#allocation4], %s237
        %s239 = sand.u32 %s119, 1
        %s240 = smul.addr %s239, 8
        %s241 = scalar_lea.vmem [#allocation8], %s240
        %v243 = vld [vmem:[%s209] sm:$0xff]
        %v244 = vpack.c.bf16 %v243, %v243
        %v245 = vld [vmem:[#allocation5] sm:$0xf]
        %v246 = vld [vmem:[#allocation5 + $0x4] sm:$0xf]
        %v247 = vld [vmem:[#allocation5 + $0x8] sm:$0xf]
        %v248 = vld [vmem:[#allocation5 + $0xc] sm:$0xf]
        %v253 = vunpack.c.l.b16 %v245
        %v254 = vunpack.c.l.b16 %v246
        %v255 = vunpack.c.l.b16 %v247
        %v256 = vunpack.c.l.b16 %v248
        %v257 = vpack.c.b16 %v254, %v253
        %v258 = vpack.c.b16 %v256, %v255
        %vm261 = vcmask 261120
        %v263 = vsel %vm261, %v244, 0
        %265 = vmatprep.subr.bf16.mxu0 0
        %266 = vmatpush1.bf16.msra.mxu0 0
        %267 = vmatprep.subr.bf16.mxu0 0
        %268 = vmatpush1.bf16.msra.mxu0 0
        %269 = vmatprep.subr.bf16.mxu0 0
        %270 = vmatpush1.bf16.msra.mxu0 0
        %271 = vmatprep.subr.bf16.mxu0 0
        %272 = vmatpush1.bf16.msra.mxu0 0
        %273 = vmatprep.subr.bf16.mxu0 0
        %274 = vmatpush1.bf16.msra.mxu0 0
        %275 = vmatprep.subr.bf16.mxu0 0
        %276 = vmatpush1.bf16.msra.mxu0 0
        %277 = vmatprep.subr.bf16.mxu0 0
        %278 = vmatpush1.bf16.msra.mxu0 %v258
        %279 = vmatprep.subr.bf16.mxu0 0
        %280 = vmatpush1.bf16.msra.mxu0 %v257
        %281 = vmatprep.subr.bf16.mxu0 0
        %282 = vmatpush2.bf16.msra.mxu0 0
        %283 = vmatprep.subr.bf16.mxu0 0
        %284 = vmatpush2.bf16.msra.mxu0 0
        %285 = vmatprep.subr.bf16.mxu0 0
        %286 = vmatpush2.bf16.msra.mxu0 0
        %287 = vmatprep.subr.bf16.mxu0 0
        %288 = vmatpush2.bf16.msra.mxu0 0
        %289 = vmatprep.subr.bf16.mxu0 0
        %290 = vmatpush2.bf16.msra.mxu0 0
        %291 = vmatprep.subr.bf16.mxu0 0
        %292 = vmatpush2.bf16.msra.mxu0 0
        %293 = vmatprep.subr.bf16.mxu0 0
        %294 = vmatpush2.bf16.msra.mxu0 0
        %295 = vmatprep.subr.bf16.mxu0 0
        %296 = vmatpush2.bf16.msra.mxu0 0
        %297 = vmatprep.mubr.bf16.mxu0 0
        %298 = vmatmul.mubr.bf16.gmra.mxu0 %v263
        %v299 = vpop.f32.mrf.mxu0
        %v300 = vadd.f32 0.0, %v299
        %v301 = vpop.f32.mrf.mxu0
        %v302 = vpop.f32.mrf.mxu0
        %v303 = vpop.f32.mrf.mxu0
        %304 = vdwg.mxu0
        %v305 = vlaneseq
        %v306 = vshrl.u32 %v305, 7
        %v307 = vlaneseq
        %v308 = vand.u32 %v307, 127
        %vm309 = vcmp.ge.s32.totalorder %v306, %v308
        %v310 = vsel %vm309, 0.0, -1e+30
        %v311 = vld [vmem:[#allocation7] sm:$0xf]
        %v312 = vld [vmem:[#allocation7 + $0x4] sm:$0xf]
        %v313 = vld [vmem:[#allocation7 + $0x8] sm:$0xf]
        %v314 = vld [vmem:[#allocation7 + $0xc] sm:$0xf]
        %v315 = vpack.c.bf16 %v300, %v300
        %317 = vrot.lane.b32.xlu0 %v315, 96
        %v318 = vpop.permute.xlu0 %317
        %vm319 = vcmask 64512
        %v321 = vsel %vm319, %v315, 0
        %v324 = vsel %vm319, %v318, 0
        %326 = vmatprep.subr.bf16.mxu0 0
        %327 = vmatpush1.bf16.xpose.msra.mxu0 0
        %328 = vmatprep.subr.bf16.mxu0 0
        %329 = vmatpush1.bf16.xpose.msra.mxu0 0
        %330 = vmatprep.subr.bf16.mxu0 0
        %331 = vmatpush1.bf16.xpose.msra.mxu0 0
        %332 = vmatprep.subr.bf16.mxu0 0
        %333 = vmatpush1.bf16.xpose.msra.mxu0 0
        %334 = vmatprep.subr.bf16.mxu0 0
        %335 = vmatpush1.bf16.xpose.msra.mxu0 0
        %336 = vmatprep.subr.bf16.mxu0 0
        %337 = vmatpush1.bf16.xpose.msra.mxu0 0
        %338 = vmatprep.subr.bf16.mxu0 0
        %339 = vmatpush1.bf16.xpose.msra.mxu0 0
        %340 = vmatprep.subr.bf16.mxu0 0
        %341 = vmatpush1.bf16.xpose.msra.mxu0 %v324
        %342 = vmatprep.subr.bf16.mxu0 0
        %343 = vmatpush2.bf16.xpose.msra.mxu0 0
        %344 = vmatprep.subr.bf16.mxu0 0
        %345 = vmatpush2.bf16.xpose.msra.mxu0 0
        %346 = vmatprep.subr.bf16.mxu0 0
        %347 = vmatpush2.bf16.xpose.msra.mxu0 0
        %348 = vmatprep.subr.bf16.mxu0 0
        %349 = vmatpush2.bf16.xpose.msra.mxu0 0
        %350 = vmatprep.subr.bf16.mxu0 0
        %351 = vmatpush2.bf16.xpose.msra.mxu0 0
        %352 = vmatprep.subr.bf16.mxu0 0
        %353 = vmatpush2.bf16.xpose.msra.mxu0 0
        %354 = vmatprep.subr.bf16.mxu0 0
        %355 = vmatpush2.bf16.xpose.msra.mxu0 0
        %356 = vmatprep.subr.bf16.mxu0 0
        %357 = vmatpush2.bf16.xpose.msra.mxu0 0
        %358 = vmatprep.mubr.bf16.mxu0 0
        %359 = vmatmul.mubr.bf16.gmra.mxu0 %v321
        %v360 = vpop.f32.mrf.mxu0
        %v361 = vadd.f32 %v310, %v360
        %v362 = vpop.f32.mrf.mxu0
        %v363 = vpop.f32.mrf.mxu0
        %v364 = vpop.f32.mrf.mxu0
        %365 = vdwg.mxu0
        %v366 = vsel %vm319, %v361, -inf
        %367 = vmax.xlane.f32.xlu0 %v366
        %v368 = vpop.xlane.xlu0 %367
        %v369 = vsub.f32 %v361, %v368
        %v370 = vmul.f32 %v369, 1.442695
        %v371 = vpow.pop %v370
        %v372 = vsel %vm319, %v371, 0.0
        %373 = vadd.xlane.f32.xlu0 %v372
        %v374 = vpop.xlane.xlu0 %373
        %v375 = vpack.c.bf16 %v371, %v371
        %376 = vrot.lane.b32.xlu0 %v315, 64
        %v377 = vpop.permute.xlu0 %376
        %v379 = vsel %vm319, %v375, 0
        %vm381 = vcmask 1043456
        %v383 = vsel %vm381, %v377, 0
        %385 = vmatprep.subr.bf16.mxu0 0
        %386 = vmatpush1.bf16.msra.mxu0 0
        %387 = vmatprep.subr.bf16.mxu0 0
        %388 = vmatpush1.bf16.msra.mxu0 0
        %389 = vmatprep.subr.bf16.mxu0 0
        %390 = vmatpush1.bf16.msra.mxu0 0
        %391 = vmatprep.subr.bf16.mxu0 0
        %392 = vmatpush1.bf16.msra.mxu0 0
        %393 = vmatprep.subr.bf16.mxu0 0
        %394 = vmatpush1.bf16.msra.mxu0 0
        %395 = vmatprep.subr.bf16.mxu0 0
        %396 = vmatpush1.bf16.msra.mxu0 0
        %397 = vmatprep.subr.bf16.mxu0 0
        %398 = vmatpush1.bf16.msra.mxu0 0
        %399 = vmatprep.subr.bf16.mxu0 0
        %400 = vmatpush1.bf16.msra.mxu0 %v383
        %401 = vmatprep.subr.bf16.mxu0 0
        %402 = vmatpush2.bf16.msra.mxu0 0
        %403 = vmatprep.subr.bf16.mxu0 0
        %404 = vmatpush2.bf16.msra.mxu0 0
        %405 = vmatprep.subr.bf16.mxu0 0
        %406 = vmatpush2.bf16.msra.mxu0 0
        %407 = vmatprep.subr.bf16.mxu0 0
        %408 = vmatpush2.bf16.msra.mxu0 0
        %409 = vmatprep.subr.bf16.mxu0 0
        %410 = vmatpush2.bf16.msra.mxu0 0
        %411 = vmatprep.subr.bf16.mxu0 0
        %412 = vmatpush2.bf16.msra.mxu0 0
        %413 = vmatprep.subr.bf16.mxu0 0
        %414 = vmatpush2.bf16.msra.mxu0 0
        %415 = vmatprep.subr.bf16.mxu0 0
        %416 = vmatpush2.bf16.msra.mxu0 0
        %417 = vmatprep.mubr.bf16.mxu0 0
        %418 = vmatmul.mubr.bf16.gmra.mxu0 %v379
        %v419 = vpop.f32.mrf.mxu0
        %v420 = vadd.f32 0.0, %v419
        %v421 = vpop.f32.mrf.mxu0
        %v422 = vpop.f32.mrf.mxu0
        %v423 = vpop.f32.mrf.mxu0
        %424 = vdwg.mxu0
        %v425 = vrcp.pop %v374
        %v426 = vmul.f32 %v420, %v425
        %v427 = vpack.c.bf16 %v426, %v426
        %428 = vrot.lane.b32.xlu0 %v315, 120
        %v429 = vpop.permute.xlu0 %428
        %430 = vrot.lane.b32.xlu0 %v315, 88
        %v431 = vpop.permute.xlu0 %430
        %v433 = vsel %vm319, %v429, 0
        %v436 = vsel %vm319, %v431, 0
        %438 = vmatprep.subr.bf16.mxu0 0
        %439 = vmatpush1.bf16.xpose.msra.mxu0 0
        %440 = vmatprep.subr.bf16.mxu0 0
        %441 = vmatpush1.bf16.xpose.msra.mxu0 0
        %442 = vmatprep.subr.bf16.mxu0 0
        %443 = vmatpush1.bf16.xpose.msra.mxu0 0
        %444 = vmatprep.subr.bf16.mxu0 0
        %445 = vmatpush1.bf16.xpose.msra.mxu0 0
        %446 = vmatprep.subr.bf16.mxu0 0
        %447 = vmatpush1.bf16.xpose.msra.mxu0 0
        %448 = vmatprep.subr.bf16.mxu0 0
        %449 = vmatpush1.bf16.xpose.msra.mxu0 0
        %450 = vmatprep.subr.bf16.mxu0 0
        %451 = vmatpush1.bf16.xpose.msra.mxu0 0
        %452 = vmatprep.subr.bf16.mxu0 0
        %453 = vmatpush1.bf16.xpose.msra.mxu0 %v436
        %454 = vmatprep.subr.bf16.mxu0 0
        %455 = vmatpush2.bf16.xpose.msra.mxu0 0
        %456 = vmatprep.subr.bf16.mxu0 0
        %457 = vmatpush2.bf16.xpose.msra.mxu0 0
        %458 = vmatprep.subr.bf16.mxu0 0
        %459 = vmatpush2.bf16.xpose.msra.mxu0 0
        %460 = vmatprep.subr.bf16.mxu0 0
        %461 = vmatpush2.bf16.xpose.msra.mxu0 0
        %462 = vmatprep.subr.bf16.mxu0 0
        %463 = vmatpush2.bf16.xpose.msra.mxu0 0
        %464 = vmatprep.subr.bf16.mxu0 0
        %465 = vmatpush2.bf16.xpose.msra.mxu0 0
        %466 = vmatprep.subr.bf16.mxu0 0
        %467 = vmatpush2.bf16.xpose.msra.mxu0 0
        %468 = vmatprep.subr.bf16.mxu0 0
        %469 = vmatpush2.bf16.xpose.msra.mxu0 0
        %470 = vmatprep.mubr.bf16.mxu0 0
        %471 = vmatmul.mubr.bf16.gmra.mxu0 %v433
        %v472 = vpop.f32.mrf.mxu0
        %v473 = vadd.f32 %v310, %v472
        %v474 = vpop.f32.mrf.mxu0
        %v475 = vpop.f32.mrf.mxu0
        %v476 = vpop.f32.mrf.mxu0
        %477 = vdwg.mxu0
        %v478 = vsel %vm319, %v473, -inf
        %479 = vmax.xlane.f32.xlu0 %v478
        %v480 = vpop.xlane.xlu0 %479
        %v481 = vsub.f32 %v473, %v480
        %v482 = vmul.f32 %v481, 1.442695
        %v483 = vpow.pop %v482
        %v484 = vsel %vm319, %v483, 0.0
        %485 = vadd.xlane.f32.xlu0 %v484
        %v486 = vpop.xlane.xlu0 %485
        %v487 = vpack.c.bf16 %v483, %v483
        %488 = vrot.lane.b32.xlu0 %v315, 56
        %v489 = vpop.permute.xlu0 %488
        %v491 = vsel %vm319, %v487, 0
        %v494 = vsel %vm381, %v489, 0
        %496 = vmatprep.subr.bf16.mxu0 0
        %497 = vmatpush1.bf16.msra.mxu0 0
        %498 = vmatprep.subr.bf16.mxu0 0
        %499 = vmatpush1.bf16.msra.mxu0 0
        %500 = vmatprep.subr.bf16.mxu0 0
        %501 = vmatpush1.bf16.msra.mxu0 0
        %502 = vmatprep.subr.bf16.mxu0 0
        %503 = vmatpush1.bf16.msra.mxu0 0
        %504 = vmatprep.subr.bf16.mxu0 0
        %505 = vmatpush1.bf16.msra.mxu0 0
        %506 = vmatprep.subr.bf16.mxu0 0
        %507 = vmatpush1.bf16.msra.mxu0 0
        %508 = vmatprep.subr.bf16.mxu0 0
        %509 = vmatpush1.bf16.msra.mxu0 0
        %510 = vmatprep.subr.bf16.mxu0 0
        %511 = vmatpush1.bf16.msra.mxu0 %v494
        %512 = vmatprep.subr.bf16.mxu0 0
        %513 = vmatpush2.bf16.msra.mxu0 0
        %514 = vmatprep.subr.bf16.mxu0 0
        %515 = vmatpush2.bf16.msra.mxu0 0
        %516 = vmatprep.subr.bf16.mxu0 0
        %517 = vmatpush2.bf16.msra.mxu0 0
        %518 = vmatprep.subr.bf16.mxu0 0
        %519 = vmatpush2.bf16.msra.mxu0 0
        %520 = vmatprep.subr.bf16.mxu0 0
        %521 = vmatpush2.bf16.msra.mxu0 0
        %522 = vmatprep.subr.bf16.mxu0 0
        %523 = vmatpush2.bf16.msra.mxu0 0
        %524 = vmatprep.subr.bf16.mxu0 0
        %525 = vmatpush2.bf16.msra.mxu0 0
        %526 = vmatprep.subr.bf16.mxu0 0
        %527 = vmatpush2.bf16.msra.mxu0 0
        %528 = vmatprep.mubr.bf16.mxu0 0
        %529 = vmatmul.mubr.bf16.gmra.mxu0 %v491
        %v530 = vpop.f32.mrf.mxu0
        %v531 = vadd.f32 0.0, %v530
        %v532 = vpop.f32.mrf.mxu0
        %v533 = vpop.f32.mrf.mxu0
        %v534 = vpop.f32.mrf.mxu0
        %535 = vdwg.mxu0
        %v536 = vrcp.pop %v486
        %v537 = vmul.f32 %v531, %v536
        %v538 = vpack.c.bf16 %v537, %v537
        %v540 = vsel %vm319, %v538, 0
        %v543 = vsel %vm381, %v312, 0
        %545 = vmatprep.subr.bf16.mxu0 0
        %546 = vmatpush1.bf16.msra.mxu0 0
        %547 = vmatprep.subr.bf16.mxu0 0
        %548 = vmatpush1.bf16.msra.mxu0 0
        %549 = vmatprep.subr.bf16.mxu0 0
        %550 = vmatpush1.bf16.msra.mxu0 0
        %551 = vmatprep.subr.bf16.mxu0 0
        %552 = vmatpush1.bf16.msra.mxu0 0
        %553 = vmatprep.subr.bf16.mxu0 0
        %554 = vmatpush1.bf16.msra.mxu0 0
        %555 = vmatprep.subr.bf16.mxu0 0
        %556 = vmatpush1.bf16.msra.mxu0 0
        %557 = vmatprep.subr.bf16.mxu0 0
        %558 = vmatpush1.bf16.msra.mxu0 0
        %559 = vmatprep.subr.bf16.mxu0 0
        %560 = vmatpush1.bf16.msra.mxu0 %v543
        %561 = vmatprep.subr.bf16.mxu0 0
        %562 = vmatpush2.bf16.msra.mxu0 0
        %563 = vmatprep.subr.bf16.mxu0 0
        %564 = vmatpush2.bf16.msra.mxu0 0
        %565 = vmatprep.subr.bf16.mxu0 0
        %566 = vmatpush2.bf16.msra.mxu0 0
        %567 = vmatprep.subr.bf16.mxu0 0
        %568 = vmatpush2.bf16.msra.mxu0 0
        %569 = vmatprep.subr.bf16.mxu0 0
        %570 = vmatpush2.bf16.msra.mxu0 0
        %571 = vmatprep.subr.bf16.mxu0 0
        %572 = vmatpush2.bf16.msra.mxu0 0
        %573 = vmatprep.subr.bf16.mxu0 0
        %574 = vmatpush2.bf16.msra.mxu0 0
        %575 = vmatprep.subr.bf16.mxu0 0
        %576 = vmatpush2.bf16.msra.mxu0 0
        %577 = vmatprep.mubr.bf16.mxu0 0
        %578 = vmatmul.mubr.bf16.gmra.mxu0 %v540
        %v579 = vpop.f32.mrf.mxu0
        %v580 = vadd.f32 0.0, %v579
        %v581 = vpop.f32.mrf.mxu0
        %v582 = vpop.f32.mrf.mxu0
        %v583 = vpop.f32.mrf.mxu0
        %584 = vdwg.mxu0
        %v586 = vsel %vm319, %v427, 0
        %v589 = vsel %vm381, %v311, 0
        %591 = vmatprep.subr.bf16.mxu0 0
        %592 = vmatpush1.bf16.msra.mxu0 0
        %593 = vmatprep.subr.bf16.mxu0 0
        %594 = vmatpush1.bf16.msra.mxu0 0
        %595 = vmatprep.subr.bf16.mxu0 0
        %596 = vmatpush1.bf16.msra.mxu0 0
        %597 = vmatprep.subr.bf16.mxu0 0
        %598 = vmatpush1.bf16.msra.mxu0 0
        %599 = vmatprep.subr.bf16.mxu0 0
        %600 = vmatpush1.bf16.msra.mxu0 0
        %601 = vmatprep.subr.bf16.mxu0 0
        %602 = vmatpush1.bf16.msra.mxu0 0
        %603 = vmatprep.subr.bf16.mxu0 0
        %604 = vmatpush1.bf16.msra.mxu0 0
        %605 = vmatprep.subr.bf16.mxu0 0
        %606 = vmatpush1.bf16.msra.mxu0 %v589
        %607 = vmatprep.subr.bf16.mxu0 0
        %608 = vmatpush2.bf16.msra.mxu0 0
        %609 = vmatprep.subr.bf16.mxu0 0
        %610 = vmatpush2.bf16.msra.mxu0 0
        %611 = vmatprep.subr.bf16.mxu0 0
        %612 = vmatpush2.bf16.msra.mxu0 0
        %613 = vmatprep.subr.bf16.mxu0 0
        %614 = vmatpush2.bf16.msra.mxu0 0
        %615 = vmatprep.subr.bf16.mxu0 0
        %616 = vmatpush2.bf16.msra.mxu0 0
        %617 = vmatprep.subr.bf16.mxu0 0
        %618 = vmatpush2.bf16.msra.mxu0 0
        %619 = vmatprep.subr.bf16.mxu0 0
        %620 = vmatpush2.bf16.msra.mxu0 0
        %621 = vmatprep.subr.bf16.mxu0 0
        %622 = vmatpush2.bf16.msra.mxu0 0
        %623 = vmatprep.mubr.bf16.mxu0 0
        %624 = vmatmul.mubr.bf16.gmra.mxu0 %v586
        %v625 = vpop.f32.mrf.mxu0
        %v626 = vadd.f32 %v580, %v625
        %v627 = vpop.f32.mrf.mxu0
        %v628 = vpop.f32.mrf.mxu0
        %v629 = vpop.f32.mrf.mxu0
        %630 = vdwg.mxu0
        %631 = vrot.lane.b32.xlu0 %v315, 112
        %v632 = vpop.permute.xlu0 %631
        %633 = vrot.lane.b32.xlu0 %v315, 80
        %v634 = vpop.permute.xlu0 %633
        %v636 = vsel %vm319, %v632, 0
        %v639 = vsel %vm319, %v634, 0
        %641 = vmatprep.subr.bf16.mxu0 0
        %642 = vmatpush1.bf16.xpose.msra.mxu0 0
        %643 = vmatprep.subr.bf16.mxu0 0
        %644 = vmatpush1.bf16.xpose.msra.mxu0 0
        %645 = vmatprep.subr.bf16.mxu0 0
        %646 = vmatpush1.bf16.xpose.msra.mxu0 0
        %647 = vmatprep.subr.bf16.mxu0 0
        %648 = vmatpush1.bf16.xpose.msra.mxu0 0
        %649 = vmatprep.subr.bf16.mxu0 0
        %650 = vmatpush1.bf16.xpose.msra.mxu0 0
        %651 = vmatprep.subr.bf16.mxu0 0
        %652 = vmatpush1.bf16.xpose.msra.mxu0 0
        %653 = vmatprep.subr.bf16.mxu0 0
        %654 = vmatpush1.bf16.xpose.msra.mxu0 0
        %655 = vmatprep.subr.bf16.mxu0 0
        %656 = vmatpush1.bf16.xpose.msra.mxu0 %v639
        %657 = vmatprep.subr.bf16.mxu0 0
        %658 = vmatpush2.bf16.xpose.msra.mxu0 0
        %659 = vmatprep.subr.bf16.mxu0 0
        %660 = vmatpush2.bf16.xpose.msra.mxu0 0
        %661 = vmatprep.subr.bf16.mxu0 0
        %662 = vmatpush2.bf16.xpose.msra.mxu0 0
        %663 = vmatprep.subr.bf16.mxu0 0
        %664 = vmatpush2.bf16.xpose.msra.mxu0 0
        %665 = vmatprep.subr.bf16.mxu0 0
        %666 = vmatpush2.bf16.xpose.msra.mxu0 0
        %667 = vmatprep.subr.bf16.mxu0 0
        %668 = vmatpush2.bf16.xpose.msra.mxu0 0
        %669 = vmatprep.subr.bf16.mxu0 0
        %670 = vmatpush2.bf16.xpose.msra.mxu0 0
        %671 = vmatprep.subr.bf16.mxu0 0
        %672 = vmatpush2.bf16.xpose.msra.mxu0 0
        %673 = vmatprep.mubr.bf16.mxu0 0
        %674 = vmatmul.mubr.bf16.gmra.mxu0 %v636
        %v675 = vpop.f32.mrf.mxu0
        %v676 = vadd.f32 %v310, %v675
        %v677 = vpop.f32.mrf.mxu0
        %v678 = vpop.f32.mrf.mxu0
        %v679 = vpop.f32.mrf.mxu0
        %680 = vdwg.mxu0
        %v681 = vsel %vm319, %v676, -inf
        %682 = vmax.xlane.f32.xlu0 %v681
        %v683 = vpop.xlane.xlu0 %682
        %v684 = vsub.f32 %v676, %v683
        %v685 = vmul.f32 %v684, 1.442695
        %v686 = vpow.pop %v685
        %v687 = vsel %vm319, %v686, 0.0
        %688 = vadd.xlane.f32.xlu0 %v687
        %v689 = vpop.xlane.xlu0 %688
        %v690 = vpack.c.bf16 %v686, %v686
        %691 = vrot.lane.b32.xlu0 %v315, 48
        %v692 = vpop.permute.xlu0 %691
        %v694 = vsel %vm319, %v690, 0
        %v697 = vsel %vm381, %v692, 0
        %699 = vmatprep.subr.bf16.mxu0 0
        %700 = vmatpush1.bf16.msra.mxu0 0
        %701 = vmatprep.subr.bf16.mxu0 0
        %702 = vmatpush1.bf16.msra.mxu0 0
        %703 = vmatprep.subr.bf16.mxu0 0
        %704 = vmatpush1.bf16.msra.mxu0 0
        %705 = vmatprep.subr.bf16.mxu0 0
        %706 = vmatpush1.bf16.msra.mxu0 0
        %707 = vmatprep.subr.bf16.mxu0 0
        %708 = vmatpush1.bf16.msra.mxu0 0
        %709 = vmatprep.subr.bf16.mxu0 0
        %710 = vmatpush1.bf16.msra.mxu0 0
        %711 = vmatprep.subr.bf16.mxu0 0
        %712 = vmatpush1.bf16.msra.mxu0 0
        %713 = vmatprep.subr.bf16.mxu0 0
        %714 = vmatpush1.bf16.msra.mxu0 %v697
        %715 = vmatprep.subr.bf16.mxu0 0
        %716 = vmatpush2.bf16.msra.mxu0 0
        %717 = vmatprep.subr.bf16.mxu0 0
        %718 = vmatpush2.bf16.msra.mxu0 0
        %719 = vmatprep.subr.bf16.mxu0 0
        %720 = vmatpush2.bf16.msra.mxu0 0
        %721 = vmatprep.subr.bf16.mxu0 0
        %722 = vmatpush2.bf16.msra.mxu0 0
        %723 = vmatprep.subr.bf16.mxu0 0
        %724 = vmatpush2.bf16.msra.mxu0 0
        %725 = vmatprep.subr.bf16.mxu0 0
        %726 = vmatpush2.bf16.msra.mxu0 0
        %727 = vmatprep.subr.bf16.mxu0 0
        %728 = vmatpush2.bf16.msra.mxu0 0
        %729 = vmatprep.subr.bf16.mxu0 0
        %730 = vmatpush2.bf16.msra.mxu0 0
        %731 = vmatprep.mubr.bf16.mxu0 0
        %732 = vmatmul.mubr.bf16.gmra.mxu0 %v694
        %v733 = vpop.f32.mrf.mxu0
        %v734 = vadd.f32 0.0, %v733
        %v735 = vpop.f32.mrf.mxu0
        %v736 = vpop.f32.mrf.mxu0
        %v737 = vpop.f32.mrf.mxu0
        %738 = vdwg.mxu0
        %v739 = vrcp.pop %v689
        %v740 = vmul.f32 %v734, %v739
        %v741 = vpack.c.bf16 %v740, %v740
        %v743 = vsel %vm319, %v741, 0
        %v746 = vsel %vm381, %v313, 0
        %748 = vmatprep.subr.bf16.mxu0 0
        %749 = vmatpush1.bf16.msra.mxu0 0
        %750 = vmatprep.subr.bf16.mxu0 0
        %751 = vmatpush1.bf16.msra.mxu0 0
        %752 = vmatprep.subr.bf16.mxu0 0
        %753 = vmatpush1.bf16.msra.mxu0 0
        %754 = vmatprep.subr.bf16.mxu0 0
        %755 = vmatpush1.bf16.msra.mxu0 0
        %756 = vmatprep.subr.bf16.mxu0 0
        %757 = vmatpush1.bf16.msra.mxu0 0
        %758 = vmatprep.subr.bf16.mxu0 0
        %759 = vmatpush1.bf16.msra.mxu0 0
        %760 = vmatprep.subr.bf16.mxu0 0
        %761 = vmatpush1.bf16.msra.mxu0 0
        %762 = vmatprep.subr.bf16.mxu0 0
        %763 = vmatpush1.bf16.msra.mxu0 %v746
        %764 = vmatprep.subr.bf16.mxu0 0
        %765 = vmatpush2.bf16.msra.mxu0 0
        %766 = vmatprep.subr.bf16.mxu0 0
        %767 = vmatpush2.bf16.msra.mxu0 0
        %768 = vmatprep.subr.bf16.mxu0 0
        %769 = vmatpush2.bf16.msra.mxu0 0
        %770 = vmatprep.subr.bf16.mxu0 0
        %771 = vmatpush2.bf16.msra.mxu0 0
        %772 = vmatprep.subr.bf16.mxu0 0
        %773 = vmatpush2.bf16.msra.mxu0 0
        %774 = vmatprep.subr.bf16.mxu0 0
        %775 = vmatpush2.bf16.msra.mxu0 0
        %776 = vmatprep.subr.bf16.mxu0 0
        %777 = vmatpush2.bf16.msra.mxu0 0
        %778 = vmatprep.subr.bf16.mxu0 0
        %779 = vmatpush2.bf16.msra.mxu0 0
        %780 = vmatprep.mubr.bf16.mxu0 0
        %781 = vmatmul.mubr.bf16.gmra.mxu0 %v743
        %v782 = vpop.f32.mrf.mxu0
        %v783 = vadd.f32 0.0, %v782
        %v784 = vpop.f32.mrf.mxu0
        %v785 = vpop.f32.mrf.mxu0
        %v786 = vpop.f32.mrf.mxu0
        %787 = vdwg.mxu0
        %v788 = vadd.f32 %v626, %v783
        %789 = vrot.lane.b32.xlu0 %v315, 104
        %v790 = vpop.permute.xlu0 %789
        %791 = vrot.lane.b32.xlu0 %v315, 72
        %v792 = vpop.permute.xlu0 %791
        %v794 = vsel %vm319, %v790, 0
        %v797 = vsel %vm319, %v792, 0
        %799 = vmatprep.subr.bf16.mxu0 0
        %800 = vmatpush1.bf16.xpose.msra.mxu0 0
        %801 = vmatprep.subr.bf16.mxu0 0
        %802 = vmatpush1.bf16.xpose.msra.mxu0 0
        %803 = vmatprep.subr.bf16.mxu0 0
        %804 = vmatpush1.bf16.xpose.msra.mxu0 0
        %805 = vmatprep.subr.bf16.mxu0 0
        %806 = vmatpush1.bf16.xpose.msra.mxu0 0
        %807 = vmatprep.subr.bf16.mxu0 0
        %808 = vmatpush1.bf16.xpose.msra.mxu0 0
        %809 = vmatprep.subr.bf16.mxu0 0
        %810 = vmatpush1.bf16.xpose.msra.mxu0 0
        %811 = vmatprep.subr.bf16.mxu0 0
        %812 = vmatpush1.bf16.xpose.msra.mxu0 0
        %813 = vmatprep.subr.bf16.mxu0 0
        %814 = vmatpush1.bf16.xpose.msra.mxu0 %v797
        %815 = vmatprep.subr.bf16.mxu0 0
        %816 = vmatpush2.bf16.xpose.msra.mxu0 0
        %817 = vmatprep.subr.bf16.mxu0 0
        %818 = vmatpush2.bf16.xpose.msra.mxu0 0
        %819 = vmatprep.subr.bf16.mxu0 0
        %820 = vmatpush2.bf16.xpose.msra.mxu0 0
        %821 = vmatprep.subr.bf16.mxu0 0
        %822 = vmatpush2.bf16.xpose.msra.mxu0 0
        %823 = vmatprep.subr.bf16.mxu0 0
        %824 = vmatpush2.bf16.xpose.msra.mxu0 0
        %825 = vmatprep.subr.bf16.mxu0 0
        %826 = vmatpush2.bf16.xpose.msra.mxu0 0
        %827 = vmatprep.subr.bf16.mxu0 0
        %828 = vmatpush2.bf16.xpose.msra.mxu0 0
        %829 = vmatprep.subr.bf16.mxu0 0
        %830 = vmatpush2.bf16.xpose.msra.mxu0 0
        %831 = vmatprep.mubr.bf16.mxu0 0
        %832 = vmatmul.mubr.bf16.gmra.mxu0 %v794
        %v833 = vpop.f32.mrf.mxu0
        %v834 = vadd.f32 %v310, %v833
        %v835 = vpop.f32.mrf.mxu0
        %v836 = vpop.f32.mrf.mxu0
        %v837 = vpop.f32.mrf.mxu0
        %838 = vdwg.mxu0
        %v839 = vsel %vm319, %v834, -inf
        %840 = vmax.xlane.f32.xlu0 %v839
        %v841 = vpop.xlane.xlu0 %840
        %v842 = vsub.f32 %v834, %v841
        %v843 = vmul.f32 %v842, 1.442695
        %v844 = vpow.pop %v843
        %v845 = vsel %vm319, %v844, 0.0
        %846 = vadd.xlane.f32.xlu0 %v845
        %v847 = vpop.xlane.xlu0 %846
        %v848 = vpack.c.bf16 %v844, %v844
        %849 = vrot.lane.b32.xlu0 %v315, 40
        %v850 = vpop.permute.xlu0 %849
        %v852 = vsel %vm319, %v848, 0
        %v855 = vsel %vm381, %v850, 0
        %857 = vmatprep.subr.bf16.mxu0 0
        %858 = vmatpush1.bf16.msra.mxu0 0
        %859 = vmatprep.subr.bf16.mxu0 0
        %860 = vmatpush1.bf16.msra.mxu0 0
        %861 = vmatprep.subr.bf16.mxu0 0
        %862 = vmatpush1.bf16.msra.mxu0 0
        %863 = vmatprep.subr.bf16.mxu0 0
        %864 = vmatpush1.bf16.msra.mxu0 0
        %865 = vmatprep.subr.bf16.mxu0 0
        %866 = vmatpush1.bf16.msra.mxu0 0
        %867 = vmatprep.subr.bf16.mxu0 0
        %868 = vmatpush1.bf16.msra.mxu0 0
        %869 = vmatprep.subr.bf16.mxu0 0
        %870 = vmatpush1.bf16.msra.mxu0 0
        %871 = vmatprep.subr.bf16.mxu0 0
        %872 = vmatpush1.bf16.msra.mxu0 %v855
        %873 = vmatprep.subr.bf16.mxu0 0
        %874 = vmatpush2.bf16.msra.mxu0 0
        %875 = vmatprep.subr.bf16.mxu0 0
        %876 = vmatpush2.bf16.msra.mxu0 0
        %877 = vmatprep.subr.bf16.mxu0 0
        %878 = vmatpush2.bf16.msra.mxu0 0
        %879 = vmatprep.subr.bf16.mxu0 0
        %880 = vmatpush2.bf16.msra.mxu0 0
        %881 = vmatprep.subr.bf16.mxu0 0
        %882 = vmatpush2.bf16.msra.mxu0 0
        %883 = vmatprep.subr.bf16.mxu0 0
        %884 = vmatpush2.bf16.msra.mxu0 0
        %885 = vmatprep.subr.bf16.mxu0 0
        %886 = vmatpush2.bf16.msra.mxu0 0
        %887 = vmatprep.subr.bf16.mxu0 0
        %888 = vmatpush2.bf16.msra.mxu0 0
        %889 = vmatprep.mubr.bf16.mxu0 0
        %890 = vmatmul.mubr.bf16.gmra.mxu0 %v852
        %v891 = vpop.f32.mrf.mxu0
        %v892 = vadd.f32 0.0, %v891
        %v893 = vpop.f32.mrf.mxu0
        %v894 = vpop.f32.mrf.mxu0
        %v895 = vpop.f32.mrf.mxu0
        %896 = vdwg.mxu0
        %v897 = vrcp.pop %v847
        %v898 = vmul.f32 %v892, %v897
        %v899 = vpack.c.bf16 %v898, %v898
        %v901 = vsel %vm319, %v899, 0
        %v904 = vsel %vm381, %v314, 0
        %906 = vmatprep.subr.bf16.mxu0 0
        %907 = vmatpush1.bf16.msra.mxu0 0
        %908 = vmatprep.subr.bf16.mxu0 0
        %909 = vmatpush1.bf16.msra.mxu0 0
        %910 = vmatprep.subr.bf16.mxu0 0
        %911 = vmatpush1.bf16.msra.mxu0 0
        %912 = vmatprep.subr.bf16.mxu0 0
        %913 = vmatpush1.bf16.msra.mxu0 0
        %914 = vmatprep.subr.bf16.mxu0 0
        %915 = vmatpush1.bf16.msra.mxu0 0
        %916 = vmatprep.subr.bf16.mxu0 0
        %917 = vmatpush1.bf16.msra.mxu0 0
        %918 = vmatprep.subr.bf16.mxu0 0
        %919 = vmatpush1.bf16.msra.mxu0 0
        %920 = vmatprep.subr.bf16.mxu0 0
        %921 = vmatpush1.bf16.msra.mxu0 %v904
        %922 = vmatprep.subr.bf16.mxu0 0
        %923 = vmatpush2.bf16.msra.mxu0 0
        %924 = vmatprep.subr.bf16.mxu0 0
        %925 = vmatpush2.bf16.msra.mxu0 0
        %926 = vmatprep.subr.bf16.mxu0 0
        %927 = vmatpush2.bf16.msra.mxu0 0
        %928 = vmatprep.subr.bf16.mxu0 0
        %929 = vmatpush2.bf16.msra.mxu0 0
        %930 = vmatprep.subr.bf16.mxu0 0
        %931 = vmatpush2.bf16.msra.mxu0 0
        %932 = vmatprep.subr.bf16.mxu0 0
        %933 = vmatpush2.bf16.msra.mxu0 0
        %934 = vmatprep.subr.bf16.mxu0 0
        %935 = vmatpush2.bf16.msra.mxu0 0
        %936 = vmatprep.subr.bf16.mxu0 0
        %937 = vmatpush2.bf16.msra.mxu0 0
        %938 = vmatprep.mubr.bf16.mxu0 0
        %939 = vmatmul.mubr.bf16.gmra.mxu0 %v901
        %v940 = vpop.f32.mrf.mxu0
        %v941 = vadd.f32 0.0, %v940
        %v942 = vpop.f32.mrf.mxu0
        %v943 = vpop.f32.mrf.mxu0
        %v944 = vpop.f32.mrf.mxu0
        %945 = vdwg.mxu0
        %v946 = vadd.f32 %v788, %v941
        %v947 = vld [vmem:[%s3] sm:$0x1]
        %v949 = vlaneseq
        %v950 = vshrl.u32 %v949, 7
        %v951 = vsub.s32 0, %v950
        %v952 = vrot.slane %v947, %v951
        %v954 = vadd.f32 %v946, %v952
        %955 = vst.msk [vmem:[%s241] sm:$0xff] %vm261, %v954
        %s956 = sand.u32 %s119, 1
        %s957 = scalar_lea.sflag [#allocation4], %s956
        %s958 = sand.u32 %s119, 1
        %s959 = smul.addr %s958, 8
        %s960 = scalar_lea.vmem [#allocation8], %s959
        // Predicated region
        $region49: #{tpu_custom_call.1} parent=35 // pred_check
          %p961 = pneg %p129
        $region50: #{tpu_custom_call.1} parent=35 // pred_check_branch
          %963 = sbr.rel (%p961) target = $region52
        $region51: #{tpu_custom_call.1} parent=35 // pred_region
          %s965 = ssub.s32 128, 128
          %966 = vsyncadd %s957, %s965
          %s967 = smul.addr %s22, 128
          %s968 = scalar_lea.hbm %s4, %s967
          %s970 = sshll.u32 %s960, 4
          %s971 = int_to_ptr.vmem [resolvable:$true] %s970
          %973 = dma.vmem_to_hbm [thread:$0]  %s971, 128, %s968, %s957
        $region52: #{tpu_custom_call.1} parent=35 // pred_fallthru
          _
      $region36: #{tpu_custom_call.1} parent=5 // pred_fallthru
        _
      %p974 = scmp.le.s32.totalorder 2, %s17
      // Predicated region
      $region53: #{tpu_custom_call.1} parent=5 // pred_check
        %p975 = pneg %p974
      $region54: #{tpu_custom_call.1} parent=5 // pred_check_branch
        %977 = sbr.rel (%p975) target = $region56
      $region55: #{tpu_custom_call.1} parent=5 // pred_region
        %s978 = ssub.s32 %s17, 2
        // Predicated region
        $region57: #{tpu_custom_call.1} parent=55 // pred_check
          %p979 = pneg %p135
        $region58: #{tpu_custom_call.1} parent=55 // pred_check_branch
          %981 = sbr.rel (%p979) target = $region60
        $region59: #{tpu_custom_call.1} parent=55 // pred_region
          %s982 = sand.u32 %s120, 1
          %s983 = scalar_lea.sflag [#allocation4], %s982
          %s984 = sand.u32 %s120, 1
          %s985 = smul.addr %s984, 8
          %s986 = scalar_lea.vmem [#allocation8], %s985
          %987 = dma.done %s983, 128
        $region60: #{tpu_custom_call.1} parent=55 // pred_fallthru
          _
      $region56: #{tpu_custom_call.1} parent=5 // pred_fallthru
        _
    $region6: #{tpu_custom_call.1} parent=1 // loop_footer
      %s21 = sadd.s32 1, %s17
    $region7: #{tpu_custom_call.1} parent=1 // loop_footer_branch
      %16 = sbr.rel target = $region3
    $region8: #{tpu_custom_call.1} parent=1 // loop_exit
      _
    %988 = vsyncpa [#allocation3], 1
    %s989 = scalar_lea.sflag [#allocation3], 1
    %990 = vsyncpa %s989, 1
    %991 = vsyncpa [#allocation6], 1
    %992 = vsyncpa [#allocation4], 1
    %s993 = scalar_lea.sflag [#allocation4], 1
    %994 = vsyncpa %s993, 1

</llo_original>
